<compile_context>
chip_gen: v5e
topology: v5e:2x2
jax: 0.10.0
libtpu: 0.0.40
codegen_flags: <defaults>
</compile_context>

<pallas_src>
import numpy as np
import jax
import jax.numpy as jnp
from jax.experimental import pallas as pl
from jax.experimental.pallas import tpu as pltpu

LEAK = 0.2


def _leaky(h):
    return jnp.maximum(h, LEAK * h)


def _make_q_kernel(L):
    """Kernel processing TB samples per grid step.

    Layouts:
      conv stage : (channels, TB*L)   -- samples on lanes, shared conv weights.
      fc / heads : (TB*H, L)/(TB*H,H) -- samples on sublanes, shared fc/head
                   weights (no block-diagonal kron).
    """

    def kernel(xy_ref, w1_ref, b1_ref, w2_ref, b2_ref, w3_ref, b3_ref,
               fcw_ref, fcb_ref, wh_ref, bh_ref, out_ref):
        x = xy_ref[0]                       # (1, TB*L) f32
        tbl = x.shape[-1]
        TB = tbl // L
        H = b1_ref.shape[0]
        bf16 = jnp.bfloat16

        # Per-sample boundary masks, built once on a single (1, TB*L) row;
        # jnp.where broadcasts them over the H sublanes (2 vregs total).
        col = jax.lax.broadcasted_iota(jnp.int32, (1, tbl), 1) % L
        first = col == 0                    # kill the x[l-1] tap at l == 0
        last = col == L - 1                 # kill the x[l+1] tap at l == L-1

        def taps(h):
            # roll(+1) -> h[:, p-1]; roll(tbl-1) == roll(-1) -> h[:, p+1]
            # (pltpu.roll requires a non-negative shift).
            h_m1 = jnp.where(first, 0.0, pltpu.roll(h, shift=1, axis=1))
            h_p1 = jnp.where(last, 0.0, pltpu.roll(h, shift=tbl - 1, axis=1))
            return h_m1, h_p1

        # conv1 (Cin=1, K=3): three VPU broadcast-FMAs (kept in f32).
        x_m1, x_p1 = taps(x)
        h = _leaky(w1_ref[:, 0:1] * x_m1 + w1_ref[:, 1:2] * x
                   + w1_ref[:, 2:3] * x_p1 + b1_ref[...])       # (H, TB*L) f32

        # conv2 / conv3: fused 3-tap conv, one (H,3H)@(3H,TB*L) matmul each.
        # bf16 operands, f32 accumulation; mask/activation math stays f32.
        def conv(h, w_ref, b_ref):
            h_m1, h_p1 = taps(h)
            t = jnp.concatenate([h_m1, h, h_p1], axis=0).astype(bf16)
            return _leaky(jnp.dot(w_ref[...], t,
                                  preferred_element_type=jnp.float32)
                          + b_ref[...])

        h = conv(h, w2_ref, b2_ref)
        h = conv(h, w3_ref, b3_ref)                             # (H, TB*L) f32

        # Relayout for the per-length Linear: samples move lanes -> sublanes,
        # (H, TB*L) -> (TB*H, L).  Static lane slices + sublane concat only.
        h_s = jnp.concatenate([h[:, n * L:(n + 1) * L] for n in range(TB)],
                              axis=0)                           # (TB*H, L)

        # fc_layers with the shared weight: (TB*H, L) @ (L, H).
        hf = _leaky(jnp.dot(h_s.astype(bf16), fcw_ref[...],
                            preferred_element_type=jnp.float32)
                    + fcb_ref[...])                             # (TB*H, H)

        # Fused [FC_means | FC_log_vars] heads: (TB*H, H) @ (H, 2Z).
        res = jnp.dot(hf.astype(bf16), wh_ref[...],
                      preferred_element_type=jnp.float32) + bh_ref[...]

        # Re-pack lane-dense: (TB*H, 2Z) -> (H, TB*2Z) so the final store is a
        # full-width (128-lane) unmasked vst.
        out_ref[0] = jnp.concatenate(
            [res[n * H:(n + 1) * H, :] for n in range(TB)], axis=1)

    return kernel


def q_forward(x, y, p, *, tb=8):
    """x: (N, signal_dim), y: (N, param_dim). Returns (mean, log_var): (N, H, Z)."""
    xy = jnp.concatenate([x, y], axis=1).astype(jnp.float32)   # (N, L)
    N, L = xy.shape
    H = p["fc_b"].shape[0]
    Z = p["bm"].shape[0]
    assert L == H, "nn.Linear(hidden, hidden) acts on the length axis -> need signal+param == hidden"
    assert p["w1"].shape[1] == 1, "kernel specialises the default num_channels == 1"

    # Pad the batch up to a multiple of TB; extra rows are sliced off at the end.
    G = pl.cdiv(N, tb)
    Np = G * tb
    if Np != N:
        xy = jnp.pad(xy, ((0, Np - N), (0, 0)))
    xy3 = xy.reshape(G, 1, tb * L)          # TB samples per grid step, on lanes

    f32, bf16 = jnp.float32, jnp.bfloat16
    # Conv weights (Cout, Cin, 3) -> flattened taps; tap k pairs with x[l+k-1].
    # MXU weights shipped in bf16 (f32 accumulation in-kernel); biases and the
    # VPU-side conv1 weight stay f32.
    w1f = p["w1"][:, 0, :].astype(f32)                                              # (H, 3)
    w2f = jnp.concatenate([p["w2"][:, :, k] for k in range(3)], axis=1).astype(bf16)  # (H, 3H)
    w3f = jnp.concatenate([p["w3"][:, :, k] for k in range(3)], axis=1).astype(bf16)  # (H, 3H)
    b1 = p["b1"].astype(f32)[:, None]
    b2 = p["b2"].astype(f32)[:, None]
    b3 = p["b3"].astype(f32)[:, None]

    # Shared fc / head weights (no block-diagonal kron -> no tb^2 growth).
    fcw = p["fc_w"].T.astype(bf16)                                # (L, H)
    fcb = p["fc_b"].astype(f32)[None, :]                          # (1, H)
    wh = jnp.concatenate([p["wm"].T, p["wv"].T], axis=1).astype(bf16)   # (H, 2Z)
    bh = jnp.concatenate([p["bm"], p["bv"]]).astype(f32)[None, :]       # (1, 2Z)

    def full(a):
        # Grid-invariant block: the pipeline fetches it once (block index never
        # changes), so per-step DMA cost is nil; double-buffered weight VMEM is
        # < 50 KiB at these sizes.
        # TODO(synk): single-buffer (pl.Buffered(1) / one-shot DMA into scratch)
        #             if tb or hidden_dim ever grow enough for it to matter.
        return pl.BlockSpec(a.shape, lambda g: (0,) * a.ndim)

    out_cols = tb * 2 * Z
    grid_spec = pltpu.PrefetchScalarGridSpec(
        num_scalar_prefetch=0,
        grid=(G,),
        in_specs=[
            pl.BlockSpec((1, 1, tb * L), lambda g: (g, 0, 0)),    # xy block
            full(w1f), full(b1),                                  # conv1
            full(w2f), full(b2),                                  # conv2
            full(w3f), full(b3),                                  # conv3
            full(fcw), full(fcb),                                 # fc_layers
            full(wh), full(bh),                                   # fused heads
        ],
        out_specs=pl.BlockSpec((1, H, out_cols), lambda g: (g, 0, 0)),
    )

    # Useful FLOPs == executed FLOPs now (no block-diagonal padding work).
    flops = Np * (2 * 3 * H * L              # conv1 (VPU FMAs)
                  + 2 * (2 * 3 * H * H * L)  # conv2 + conv3
                  + 2 * H * L * H            # fc
                  + 2 * H * H * 2 * Z)       # heads
    bytes_accessed = (4 * (Np * L + w1f.size + b1.size + b2.size + b3.size
                           + fcb.size + bh.size + G * H * out_cols)
                      + 2 * (w2f.size + w3f.size + fcw.size + wh.size))

    out = pl.pallas_call(
        _make_q_kernel(L),
        out_shape=jax.ShapeDtypeStruct((G, H, out_cols), jnp.float32),
        grid_spec=grid_spec,
        compiler_params=pltpu.CompilerParams(
            dimension_semantics=("parallel",)),   # G>=2 keeps both v7x TCs busy
        cost_estimate=pl.CostEstimate(flops=flops, transcendentals=0,
                                      bytes_accessed=bytes_accessed),
    )(xy3, w1f, b1, w2f, b2, w3f, b3, fcw, fcb, wh, bh)

    # (G, H, tb*2Z) lane-dense slab -> (N, H, 2Z); un-interleave in plain JAX.
    out = out.reshape(G, H, tb, 2 * Z).transpose(0, 2, 1, 3).reshape(Np, H, 2 * Z)
    out = out[:N]
    return out[..., :Z], out[..., Z:]


# ----------------------------- reference (plain JAX) -----------------------------
def ref_forward(x, y, p):
    xy = jnp.concatenate([x, y], axis=1)[:, None, :]  # (N, 1, L)
    h = xy
    for wk, bk in (("w1", "b1"), ("w2", "b2"), ("w3", "b3")):
        h = jax.lax.conv_general_dilated(
            h, p[wk], window_strides=(1,), padding=((1, 1),),
            dimension_numbers=("NCH", "OIH", "NCH"))
        h = _leaky(h + p[bk][None, :, None])
    h = _leaky(jnp.einsum("ncl,jl->ncj", h, p["fc_w"]) + p["fc_b"])
    mean = jnp.einsum("ncj,mj->ncm", h, p["wm"]) + p["bm"]
    log_var = jnp.einsum("ncj,mj->ncm", h, p["wv"]) + p["bv"]
    return mean, log_var


def init_params(key, hidden_dim, latent_dim, num_channels=1, k=3):
    ks = jax.random.split(key, 12)
    u = lambda kk, shape, s: jax.random.uniform(kk, shape, jnp.float32, -s, s)
    return dict(
        w1=u(ks[0], (hidden_dim, num_channels, k), 0.3),
        b1=u(ks[1], (hidden_dim,), 0.1),
        w2=u(ks[2], (hidden_dim, hidden_dim, k), 0.15),
        b2=u(ks[3], (hidden_dim,), 0.1),
        w3=u(ks[4], (hidden_dim, hidden_dim, k), 0.15),
        b3=u(ks[5], (hidden_dim,), 0.1),
        fc_w=u(ks[6], (hidden_dim, hidden_dim), 0.15),
        fc_b=u(ks[7], (hidden_dim,), 0.1),
        wm=u(ks[8], (latent_dim, hidden_dim), 0.15),
        bm=u(ks[9], (latent_dim,), 0.1),
        wv=u(ks[10], (latent_dim, hidden_dim), 0.15),
        bv=u(ks[11], (latent_dim,), 0.1),
    )


if __name__ == "__main__":
    # Shapes: the module requires signal_dim + param_dim == hidden_dim (see note above).
    N, signal_dim, param_dim, hidden_dim, latent_dim = 16, 24, 8, 32, 8

    key = jax.random.PRNGKey(0)
    kx, ky, kp = jax.random.split(key, 3)
    x = jax.random.normal(kx, (N, signal_dim), jnp.float32)
    y = jax.random.normal(ky, (N, param_dim), jnp.float32)
    params = init_params(kp, hidden_dim, latent_dim)

    mean, log_var = q_forward(x, y, params)          # grid=(2,), TB=8 per step
    jax.block_until_ready((mean, log_var))

    mean_r, log_var_r = ref_forward(x, y, params)
    # bf16 matmul operands with f32 accumulation -> tolerance looser than pure f32.
    np.testing.assert_allclose(np.asarray(mean), np.asarray(mean_r), rtol=2e-2, atol=2e-2)
    np.testing.assert_allclose(np.asarray(log_var), np.asarray(log_var_r), rtol=2e-2, atol=2e-2)

    # Ragged batch: exercises the pad-to-TB path (N=5 -> one grid step of 8).
    mean2, log_var2 = q_forward(x[:5], y[:5], params)
    jax.block_until_ready((mean2, log_var2))
    np.testing.assert_allclose(np.asarray(mean2), np.asarray(mean_r[:5]), rtol=2e-2, atol=2e-2)
    np.testing.assert_allclose(np.asarray(log_var2), np.asarray(log_var_r[:5]), rtol=2e-2, atol=2e-2)

    print("KERNEL_OK")
</pallas_src>

<mosaic_0001>
module attributes {stable_mosaic.version = 11 : i64} {
  func.func @kernel(%arg0: i32, %arg1: memref<1x1x256xf32, #tpu.memory_space<vmem>>, %arg2: memref<32x3xf32, #tpu.memory_space<vmem>>, %arg3: memref<32x1xf32, #tpu.memory_space<vmem>>, %arg4: memref<32x96xbf16, #tpu.memory_space<vmem>>, %arg5: memref<32x1xf32, #tpu.memory_space<vmem>>, %arg6: memref<32x96xbf16, #tpu.memory_space<vmem>>, %arg7: memref<32x1xf32, #tpu.memory_space<vmem>>, %arg8: memref<32x32xbf16, #tpu.memory_space<vmem>>, %arg9: memref<1x32xf32, #tpu.memory_space<vmem>>, %arg10: memref<32x16xbf16, #tpu.memory_space<vmem>>, %arg11: memref<1x16xf32, #tpu.memory_space<vmem>>, %arg12: memref<1x32x128xf32, #tpu.memory_space<vmem>>) attributes {dimension_semantics = [#tpu.dimension_semantics<parallel>], iteration_bounds = array<i64: 2>, scalar_prefetch = 0 : i64, scratch_operands = 0 : i64, tpu.core_type = #tpu.core_type<tc>, window_params = [{transform_indices = @transform_0, window_bounds = array<i64: 1, 1, 256>}, {pipeline_mode = #tpu.pipeline_mode<synchronous>, transform_indices = @transform_1, window_bounds = array<i64: 32, 3>}, {pipeline_mode = #tpu.pipeline_mode<synchronous>, transform_indices = @transform_2, window_bounds = array<i64: 32, 1>}, {pipeline_mode = #tpu.pipeline_mode<synchronous>, transform_indices = @transform_3, window_bounds = array<i64: 32, 96>}, {pipeline_mode = #tpu.pipeline_mode<synchronous>, transform_indices = @transform_4, window_bounds = array<i64: 32, 1>}, {pipeline_mode = #tpu.pipeline_mode<synchronous>, transform_indices = @transform_5, window_bounds = array<i64: 32, 96>}, {pipeline_mode = #tpu.pipeline_mode<synchronous>, transform_indices = @transform_6, window_bounds = array<i64: 32, 1>}, {pipeline_mode = #tpu.pipeline_mode<synchronous>, transform_indices = @transform_7, window_bounds = array<i64: 32, 32>}, {pipeline_mode = #tpu.pipeline_mode<synchronous>, transform_indices = @transform_8, window_bounds = array<i64: 1, 32>}, {pipeline_mode = #tpu.pipeline_mode<synchronous>, transform_indices = @transform_9, window_bounds = array<i64: 32, 16>}, {pipeline_mode = #tpu.pipeline_mode<synchronous>, transform_indices = @transform_10, window_bounds = array<i64: 1, 16>}, {transform_indices = @transform_11, window_bounds = array<i64: 1, 32, 128>}]} {
    %c0 = arith.constant 0 : index
    %c0_0 = arith.constant 0 : index
    %c0_1 = arith.constant 0 : index
    %0 = vector.load %arg1[%c0, %c0_0, %c0_1] : memref<1x1x256xf32, #tpu.memory_space<vmem>>, vector<1x1x256xf32>
    %1 = vector.shape_cast %0 : vector<1x1x256xf32> to vector<1x256xf32>
    %2 = tpu.iota {dimensions = array<i32: 1>} : vector<1x256xi32>
    %c32_i32 = arith.constant 32 : i32
    %c0_i32 = arith.constant 0 : i32
    %3 = arith.cmpi eq, %c32_i32, %c0_i32 : i32
    %c1_i32 = arith.constant 1 : i32
    %4 = arith.select %3, %c1_i32, %c32_i32 : i32
    %5 = vector.broadcast %4 : i32 to vector<1x256xi32>
    %6 = arith.remsi %2, %5 : vector<1x256xi32>
    %c0_i32_2 = arith.constant 0 : i32
    %7 = vector.broadcast %c0_i32_2 : i32 to vector<1x256xi32>
    %8 = arith.cmpi ne, %6, %7 : vector<1x256xi32>
    %c0_i32_3 = arith.constant 0 : i32
    %9 = vector.broadcast %c0_i32_3 : i32 to vector<1x256xi32>
    %10 = arith.cmpi slt, %6, %9 : vector<1x256xi32>
    %c0_i32_4 = arith.constant 0 : i32
    %11 = arith.cmpi slt, %4, %c0_i32_4 : i32
    %12 = vector.broadcast %11 : i1 to vector<1x256xi1>
    %13 = vector.broadcast %12 : vector<1x256xi1> to vector<1x256xi1>
    %14 = arith.xori %10, %13 : vector<1x256xi1>
    %15 = arith.andi %14, %8 : vector<1x256xi1>
    %16 = vector.broadcast %4 : i32 to vector<1x256xi32>
    %17 = arith.addi %6, %16 : vector<1x256xi32>
    %18 = arith.select %15, %17, %6 : vector<1x256xi1>, vector<1x256xi32>
    %c0_i32_5 = arith.constant 0 : i32
    %19 = vector.broadcast %c0_i32_5 : i32 to vector<1x256xi32>
    %20 = arith.cmpi eq, %18, %19 : vector<1x256xi32>
    %c31_i32 = arith.constant 31 : i32
    %21 = vector.broadcast %c31_i32 : i32 to vector<1x256xi32>
    %22 = arith.cmpi eq, %18, %21 : vector<1x256xi32>
    %c1_i32_6 = arith.constant 1 : i32
    %23 = tpu.dynamic_rotate %1 by %c1_i32_6 dim 1 : vector<1x256xf32>, i32 -> vector<1x256xf32>
    %cst = arith.constant 0.000000e+00 : f32
    %24 = vector.broadcast %cst : f32 to vector<1x256xf32>
    %25 = arith.select %20, %24, %23 : vector<1x256xi1>, vector<1x256xf32>
    %c255_i32 = arith.constant 255 : i32
    %26 = tpu.dynamic_rotate %1 by %c255_i32 dim 1 : vector<1x256xf32>, i32 -> vector<1x256xf32>
    %cst_7 = arith.constant 0.000000e+00 : f32
    %27 = vector.broadcast %cst_7 : f32 to vector<1x256xf32>
    %28 = arith.select %22, %27, %26 : vector<1x256xi1>, vector<1x256xf32>
    %c0_8 = arith.constant 0 : index
    %c0_9 = arith.constant 0 : index
    %29 = vector.load %arg2[%c0_8, %c0_9] : memref<32x3xf32, #tpu.memory_space<vmem>>, vector<32x1xf32>
    %30 = vector.broadcast %29 : vector<32x1xf32> to vector<32x256xf32>
    %31 = vector.broadcast %25 : vector<1x256xf32> to vector<32x256xf32>
    %32 = arith.mulf %30, %31 : vector<32x256xf32>
    %c0_10 = arith.constant 0 : index
    %c1 = arith.constant 1 : index
    %33 = vector.load %arg2[%c0_10, %c1] : memref<32x3xf32, #tpu.memory_space<vmem>>, vector<32x1xf32>
    %34 = vector.broadcast %33 : vector<32x1xf32> to vector<32x256xf32>
    %35 = vector.broadcast %1 : vector<1x256xf32> to vector<32x256xf32>
    %36 = arith.mulf %34, %35 : vector<32x256xf32>
    %37 = arith.addf %32, %36 : vector<32x256xf32>
    %c0_11 = arith.constant 0 : index
    %c2 = arith.constant 2 : index
    %38 = vector.load %arg2[%c0_11, %c2] : memref<32x3xf32, #tpu.memory_space<vmem>>, vector<32x1xf32>
    %39 = vector.broadcast %38 : vector<32x1xf32> to vector<32x256xf32>
    %40 = vector.broadcast %28 : vector<1x256xf32> to vector<32x256xf32>
    %41 = arith.mulf %39, %40 : vector<32x256xf32>
    %42 = arith.addf %37, %41 : vector<32x256xf32>
    %c0_12 = arith.constant 0 : index
    %c0_13 = arith.constant 0 : index
    %43 = vector.load %arg3[%c0_12, %c0_13] : memref<32x1xf32, #tpu.memory_space<vmem>>, vector<32x1xf32>
    %44 = vector.broadcast %43 : vector<32x1xf32> to vector<32x256xf32>
    %45 = arith.addf %42, %44 : vector<32x256xf32>
    %cst_14 = arith.constant 2.000000e-01 : f32
    %46 = vector.broadcast %cst_14 : f32 to vector<32x256xf32>
    %47 = arith.mulf %46, %45 : vector<32x256xf32>
    %48 = arith.maximumf %45, %47 : vector<32x256xf32>
    %c1_i32_15 = arith.constant 1 : i32
    %49 = tpu.dynamic_rotate %48 by %c1_i32_15 dim 1 : vector<32x256xf32>, i32 -> vector<32x256xf32>
    %cst_16 = arith.constant 0.000000e+00 : f32
    %50 = vector.shape_cast %20 : vector<1x256xi1> to vector<1x256xi1>
    %51 = vector.broadcast %50 : vector<1x256xi1> to vector<32x256xi1>
    %52 = vector.broadcast %cst_16 : f32 to vector<32x256xf32>
    %53 = arith.select %51, %52, %49 : vector<32x256xi1>, vector<32x256xf32>
    %c255_i32_17 = arith.constant 255 : i32
    %54 = tpu.dynamic_rotate %48 by %c255_i32_17 dim 1 : vector<32x256xf32>, i32 -> vector<32x256xf32>
    %cst_18 = arith.constant 0.000000e+00 : f32
    %55 = vector.shape_cast %22 : vector<1x256xi1> to vector<1x256xi1>
    %56 = vector.broadcast %55 : vector<1x256xi1> to vector<32x256xi1>
    %57 = vector.broadcast %cst_18 : f32 to vector<32x256xf32>
    %58 = arith.select %56, %57, %54 : vector<32x256xi1>, vector<32x256xf32>
    %59 = tpu.concatenate %53, %48, %58 in 0 : vector<32x256xf32>, vector<32x256xf32>, vector<32x256xf32> -> vector<96x256xf32>
    %60 = arith.truncf %59 : vector<96x256xf32> to vector<96x256xbf16>
    %c0_19 = arith.constant 0 : index
    %c0_20 = arith.constant 0 : index
    %61 = vector.load %arg4[%c0_19, %c0_20] : memref<32x96xbf16, #tpu.memory_space<vmem>>, vector<32x96xbf16>
    %cst_21 = arith.constant dense<0.000000e+00> : vector<32x256xf32>
    %62 = tpu.matmul %61, %60, %cst_21 {dimension_numbers = #tpu.dot_dimension_numbers<[1], [0], [0], [1], [0, 0, 1, 1], [], []>} : vector<32x96xbf16>, vector<96x256xbf16>, vector<32x256xf32> -> vector<32x256xf32>
    %c0_22 = arith.constant 0 : index
    %c0_23 = arith.constant 0 : index
    %63 = vector.load %arg5[%c0_22, %c0_23] : memref<32x1xf32, #tpu.memory_space<vmem>>, vector<32x1xf32>
    %64 = vector.broadcast %63 : vector<32x1xf32> to vector<32x256xf32>
    %65 = arith.addf %62, %64 : vector<32x256xf32>
    %cst_24 = arith.constant 2.000000e-01 : f32
    %66 = vector.broadcast %cst_24 : f32 to vector<32x256xf32>
    %67 = arith.mulf %66, %65 : vector<32x256xf32>
    %68 = arith.maximumf %65, %67 : vector<32x256xf32>
    %c1_i32_25 = arith.constant 1 : i32
    %69 = tpu.dynamic_rotate %68 by %c1_i32_25 dim 1 : vector<32x256xf32>, i32 -> vector<32x256xf32>
    %cst_26 = arith.constant 0.000000e+00 : f32
    %70 = vector.shape_cast %20 : vector<1x256xi1> to vector<1x256xi1>
    %71 = vector.broadcast %70 : vector<1x256xi1> to vector<32x256xi1>
    %72 = vector.broadcast %cst_26 : f32 to vector<32x256xf32>
    %73 = arith.select %71, %72, %69 : vector<32x256xi1>, vector<32x256xf32>
    %c255_i32_27 = arith.constant 255 : i32
    %74 = tpu.dynamic_rotate %68 by %c255_i32_27 dim 1 : vector<32x256xf32>, i32 -> vector<32x256xf32>
    %cst_28 = arith.constant 0.000000e+00 : f32
    %75 = vector.shape_cast %22 : vector<1x256xi1> to vector<1x256xi1>
    %76 = vector.broadcast %75 : vector<1x256xi1> to vector<32x256xi1>
    %77 = vector.broadcast %cst_28 : f32 to vector<32x256xf32>
    %78 = arith.select %76, %77, %74 : vector<32x256xi1>, vector<32x256xf32>
    %79 = tpu.concatenate %73, %68, %78 in 0 : vector<32x256xf32>, vector<32x256xf32>, vector<32x256xf32> -> vector<96x256xf32>
    %80 = arith.truncf %79 : vector<96x256xf32> to vector<96x256xbf16>
    %c0_29 = arith.constant 0 : index
    %c0_30 = arith.constant 0 : index
    %81 = vector.load %arg6[%c0_29, %c0_30] : memref<32x96xbf16, #tpu.memory_space<vmem>>, vector<32x96xbf16>
    %cst_31 = arith.constant dense<0.000000e+00> : vector<32x256xf32>
    %82 = tpu.matmul %81, %80, %cst_31 {dimension_numbers = #tpu.dot_dimension_numbers<[1], [0], [0], [1], [0, 0, 1, 1], [], []>} : vector<32x96xbf16>, vector<96x256xbf16>, vector<32x256xf32> -> vector<32x256xf32>
    %c0_32 = arith.constant 0 : index
    %c0_33 = arith.constant 0 : index
    %83 = vector.load %arg7[%c0_32, %c0_33] : memref<32x1xf32, #tpu.memory_space<vmem>>, vector<32x1xf32>
    %84 = vector.broadcast %83 : vector<32x1xf32> to vector<32x256xf32>
    %85 = arith.addf %82, %84 : vector<32x256xf32>
    %cst_34 = arith.constant 2.000000e-01 : f32
    %86 = vector.broadcast %cst_34 : f32 to vector<32x256xf32>
    %87 = arith.mulf %86, %85 : vector<32x256xf32>
    %88 = arith.maximumf %85, %87 : vector<32x256xf32>
    %89 = vector.extract_strided_slice %88 {offsets = [0, 0], sizes = [32, 32], strides = [1, 1]} : vector<32x256xf32> to vector<32x32xf32>
    %90 = vector.extract_strided_slice %88 {offsets = [0, 32], sizes = [32, 32], strides = [1, 1]} : vector<32x256xf32> to vector<32x32xf32>
    %91 = vector.extract_strided_slice %88 {offsets = [0, 64], sizes = [32, 32], strides = [1, 1]} : vector<32x256xf32> to vector<32x32xf32>
    %92 = vector.extract_strided_slice %88 {offsets = [0, 96], sizes = [32, 32], strides = [1, 1]} : vector<32x256xf32> to vector<32x32xf32>
    %93 = vector.extract_strided_slice %88 {offsets = [0, 128], sizes = [32, 32], strides = [1, 1]} : vector<32x256xf32> to vector<32x32xf32>
    %94 = vector.extract_strided_slice %88 {offsets = [0, 160], sizes = [32, 32], strides = [1, 1]} : vector<32x256xf32> to vector<32x32xf32>
    %95 = vector.extract_strided_slice %88 {offsets = [0, 192], sizes = [32, 32], strides = [1, 1]} : vector<32x256xf32> to vector<32x32xf32>
    %96 = vector.extract_strided_slice %88 {offsets = [0, 224], sizes = [32, 32], strides = [1, 1]} : vector<32x256xf32> to vector<32x32xf32>
    %97 = tpu.concatenate %89, %90, %91, %92, %93, %94, %95, %96 in 0 : vector<32x32xf32>, vector<32x32xf32>, vector<32x32xf32>, vector<32x32xf32>, vector<32x32xf32>, vector<32x32xf32>, vector<32x32xf32>, vector<32x32xf32> -> vector<256x32xf32>
    %98 = arith.truncf %97 : vector<256x32xf32> to vector<256x32xbf16>
    %c0_35 = arith.constant 0 : index
    %c0_36 = arith.constant 0 : index
    %99 = vector.load %arg8[%c0_35, %c0_36] : memref<32x32xbf16, #tpu.memory_space<vmem>>, vector<32x32xbf16>
    %cst_37 = arith.constant dense<0.000000e+00> : vector<256x32xf32>
    %100 = tpu.matmul %98, %99, %cst_37 {dimension_numbers = #tpu.dot_dimension_numbers<[1], [0], [0], [1], [0, 0, 1, 1], [], []>} : vector<256x32xbf16>, vector<32x32xbf16>, vector<256x32xf32> -> vector<256x32xf32>
    %c0_38 = arith.constant 0 : index
    %c0_39 = arith.constant 0 : index
    %101 = vector.load %arg9[%c0_38, %c0_39] : memref<1x32xf32, #tpu.memory_space<vmem>>, vector<1x32xf32>
    %102 = vector.broadcast %101 : vector<1x32xf32> to vector<256x32xf32>
    %103 = arith.addf %100, %102 : vector<256x32xf32>
    %cst_40 = arith.constant 2.000000e-01 : f32
    %104 = vector.broadcast %cst_40 : f32 to vector<256x32xf32>
    %105 = arith.mulf %104, %103 : vector<256x32xf32>
    %106 = arith.maximumf %103, %105 : vector<256x32xf32>
    %107 = arith.truncf %106 : vector<256x32xf32> to vector<256x32xbf16>
    %c0_41 = arith.constant 0 : index
    %c0_42 = arith.constant 0 : index
    %108 = vector.load %arg10[%c0_41, %c0_42] : memref<32x16xbf16, #tpu.memory_space<vmem>>, vector<32x16xbf16>
    %cst_43 = arith.constant dense<0.000000e+00> : vector<256x16xf32>
    %109 = tpu.matmul %107, %108, %cst_43 {dimension_numbers = #tpu.dot_dimension_numbers<[1], [0], [0], [1], [0, 0, 1, 1], [], []>} : vector<256x32xbf16>, vector<32x16xbf16>, vector<256x16xf32> -> vector<256x16xf32>
    %c0_44 = arith.constant 0 : index
    %c0_45 = arith.constant 0 : index
    %110 = vector.load %arg11[%c0_44, %c0_45] : memref<1x16xf32, #tpu.memory_space<vmem>>, vector<1x16xf32>
    %111 = vector.broadcast %110 : vector<1x16xf32> to vector<256x16xf32>
    %112 = arith.addf %109, %111 : vector<256x16xf32>
    %113 = vector.extract_strided_slice %112 {offsets = [0, 0], sizes = [32, 16], strides = [1, 1]} : vector<256x16xf32> to vector<32x16xf32>
    %114 = vector.extract_strided_slice %112 {offsets = [32, 0], sizes = [32, 16], strides = [1, 1]} : vector<256x16xf32> to vector<32x16xf32>
    %115 = vector.extract_strided_slice %112 {offsets = [64, 0], sizes = [32, 16], strides = [1, 1]} : vector<256x16xf32> to vector<32x16xf32>
    %116 = vector.extract_strided_slice %112 {offsets = [96, 0], sizes = [32, 16], strides = [1, 1]} : vector<256x16xf32> to vector<32x16xf32>
    %117 = vector.extract_strided_slice %112 {offsets = [128, 0], sizes = [32, 16], strides = [1, 1]} : vector<256x16xf32> to vector<32x16xf32>
    %118 = vector.extract_strided_slice %112 {offsets = [160, 0], sizes = [32, 16], strides = [1, 1]} : vector<256x16xf32> to vector<32x16xf32>
    %119 = vector.extract_strided_slice %112 {offsets = [192, 0], sizes = [32, 16], strides = [1, 1]} : vector<256x16xf32> to vector<32x16xf32>
    %120 = vector.extract_strided_slice %112 {offsets = [224, 0], sizes = [32, 16], strides = [1, 1]} : vector<256x16xf32> to vector<32x16xf32>
    %121 = tpu.concatenate %113, %114, %115, %116, %117, %118, %119, %120 in 1 : vector<32x16xf32>, vector<32x16xf32>, vector<32x16xf32>, vector<32x16xf32>, vector<32x16xf32>, vector<32x16xf32>, vector<32x16xf32>, vector<32x16xf32> -> vector<32x128xf32>
    %c0_46 = arith.constant 0 : index
    %c0_47 = arith.constant 0 : index
    %c0_48 = arith.constant 0 : index
    %122 = vector.load %arg12[%c0_46, %c0_47, %c0_48] : memref<1x32x128xf32, #tpu.memory_space<vmem>>, vector<1x32x128xf32>
    %123 = vector.shape_cast %122 : vector<1x32x128xf32> to vector<32x128xf32>
    %124 = vector.shape_cast %121 : vector<32x128xf32> to vector<1x32x128xf32>
    tpu.vector_store %arg12[%c0_46, %c0_47, %c0_48], %124 {strides = array<i32>} : memref<1x32x128xf32, #tpu.memory_space<vmem>>, vector<1x32x128xf32>,
    return
  }
  func.func @transform_0(%arg0: i32) -> (i32, i32, i32) {
    %c0_i32 = arith.constant 0 : i32
    %c0_i32_0 = arith.constant 0 : i32
    %c0_i32_1 = arith.constant 0 : i32
    return %arg0, %c0_i32, %c0_i32_0 : i32, i32, i32
  }
  func.func @transform_1(%arg0: i32) -> (i32, i32) {
    %c0_i32 = arith.constant 0 : i32
    %c0_i32_0 = arith.constant 0 : i32
    %c0_i32_1 = arith.constant 0 : i32
    return %c0_i32, %c0_i32_0 : i32, i32
  }
  func.func @transform_2(%arg0: i32) -> (i32, i32) {
    %c0_i32 = arith.constant 0 : i32
    %c0_i32_0 = arith.constant 0 : i32
    %c0_i32_1 = arith.constant 0 : i32
    return %c0_i32, %c0_i32_0 : i32, i32
  }
  func.func @transform_3(%arg0: i32) -> (i32, i32) {
    %c0_i32 = arith.constant 0 : i32
    %c0_i32_0 = arith.constant 0 : i32
    %c0_i32_1 = arith.constant 0 : i32
    return %c0_i32, %c0_i32_0 : i32, i32
  }
  func.func @transform_4(%arg0: i32) -> (i32, i32) {
    %c0_i32 = arith.constant 0 : i32
    %c0_i32_0 = arith.constant 0 : i32
    %c0_i32_1 = arith.constant 0 : i32
    return %c0_i32, %c0_i32_0 : i32, i32
  }
  func.func @transform_5(%arg0: i32) -> (i32, i32) {
    %c0_i32 = arith.constant 0 : i32
    %c0_i32_0 = arith.constant 0 : i32
    %c0_i32_1 = arith.constant 0 : i32
    return %c0_i32, %c0_i32_0 : i32, i32
  }
  func.func @transform_6(%arg0: i32) -> (i32, i32) {
    %c0_i32 = arith.constant 0 : i32
    %c0_i32_0 = arith.constant 0 : i32
    %c0_i32_1 = arith.constant 0 : i32
    return %c0_i32, %c0_i32_0 : i32, i32
  }
  func.func @transform_7(%arg0: i32) -> (i32, i32) {
    %c0_i32 = arith.constant 0 : i32
    %c0_i32_0 = arith.constant 0 : i32
    %c0_i32_1 = arith.constant 0 : i32
    return %c0_i32, %c0_i32_0 : i32, i32
  }
  func.func @transform_8(%arg0: i32) -> (i32, i32) {
    %c0_i32 = arith.constant 0 : i32
    %c0_i32_0 = arith.constant 0 : i32
    %c0_i32_1 = arith.constant 0 : i32
    return %c0_i32, %c0_i32_0 : i32, i32
  }
  func.func @transform_9(%arg0: i32) -> (i32, i32) {
    %c0_i32 = arith.constant 0 : i32
    %c0_i32_0 = arith.constant 0 : i32
    %c0_i32_1 = arith.constant 0 : i32
    return %c0_i32, %c0_i32_0 : i32, i32
  }
  func.func @transform_10(%arg0: i32) -> (i32, i32) {
    %c0_i32 = arith.constant 0 : i32
    %c0_i32_0 = arith.constant 0 : i32
    %c0_i32_1 = arith.constant 0 : i32
    return %c0_i32, %c0_i32_0 : i32, i32
  }
  func.func @transform_11(%arg0: i32) -> (i32, i32, i32) {
    %c0_i32 = arith.constant 0 : i32
    %c0_i32_0 = arith.constant 0 : i32
    %c0_i32_1 = arith.constant 0 : i32
    return %arg0, %c0_i32, %c0_i32_0 : i32, i32, i32
  }
}

</mosaic_0001>

<llo_original>
// kernel: tpu_custom_call.1
$region0: #{tpu_custom_call.1}
  #allocation0 [shape = 'u32[]', space=smem, size = 0x4, offset = 0x4, fixed_abs, tag = 'smem constant byte address 0x4 - core index']
  #allocation1 [shape = 'u32[72,128]{1,0:T(1,128)}', space=vmem, size = 0x9000, scoped, tag = 'internal scratch']
  %s0 = inlined_call_operand.vmem [shape: f32[2,1,256], index: 0, kind: input, shape index: {}]
  %s1 = inlined_call_operand.vmem [shape: f32[32,3], index: 1, kind: input, shape index: {}]
  %s2 = inlined_call_operand.vmem [shape: f32[32,1], index: 2, kind: input, shape index: {}]
  %s3 = inlined_call_operand.vmem [shape: bf16[32,96], index: 3, kind: input, shape index: {}]
  %s4 = inlined_call_operand.vmem [shape: f32[32,1], index: 4, kind: input, shape index: {}]
  %s5 = inlined_call_operand.vmem [shape: bf16[32,96], index: 5, kind: input, shape index: {}]
  %s6 = inlined_call_operand.vmem [shape: f32[32,1], index: 6, kind: input, shape index: {}]
  %s7 = inlined_call_operand.vmem [shape: bf16[32,32], index: 7, kind: input, shape index: {}]
  %s8 = inlined_call_operand.vmem [shape: f32[1,32], index: 8, kind: input, shape index: {}]
  %s9 = inlined_call_operand.vmem [shape: bf16[32,16], index: 9, kind: input, shape index: {}]
  %s10 = inlined_call_operand.vmem [shape: f32[1,16], index: 10, kind: input, shape index: {}]
  %s11 = inlined_call_operand.hbm [shape: f32[2,32,128], index: 11, kind: output, shape index: {}]
  %s12 = sld [smem:[#allocation0]]
  $region77: #{tpu_custom_call.1} parent=0
    _
  %s14 = ssub.s32 1, %s12
  %s15 = scalar_select 0, %s14, %s12
  $region1: #{tpu_custom_call.1} parent=0
    #allocation2 [shape = 'u8[32768]{0}', space=vmem, size = 0x8000, scoped, tag = 'output window, operand 0']
    #allocation3 [shape = 's32[2]{0}', space=sflag, size = 0x8, scoped, tag = 'scoped memory for tpu_custom_call.1']
    %16 = vsyncpa [#allocation3], 0
    %s17 = scalar_lea.sflag [#allocation3], 1
    %18 = vsyncpa %s17, 0
    loop: start=0, step=1, limit=4
    $region2: #{tpu_custom_call.1} parent=1 // loop_pre_header
      _
    $region3: #{tpu_custom_call.1} parent=1 // loop_header
      %s20 = sphi 0, %s24
      %p21 = scmp.ge.s32.totalorder %s20, 4
      %s30 = sphi 0, %s32
      %s33 = sphi 0, %s30
      %s34 = sphi 0, %s33
      %s50 = sphi 0, %s34
      %s54 = sphi 0, %s54
      %s56 = sphi 0, %s54
      %s57 = sphi 0, %s56
      %s71 = sphi 0, %s57
      %s75 = sphi 0, %s75
      %s77 = sphi 0, %s75
      %s78 = sphi 0, %s77
      %s92 = sphi 0, %s78
      %s96 = sphi 0, %s96
      %s98 = sphi 0, %s96
      %s99 = sphi 0, %s98
      %s113 = sphi 0, %s99
      %s117 = sphi 0, %s117
      %s119 = sphi 0, %s117
      %s120 = sphi 0, %s119
      %s134 = sphi 0, %s120
      %s138 = sphi 0, %s138
      %s140 = sphi 0, %s138
      %s141 = sphi 0, %s140
      %s155 = sphi 0, %s141
      %s159 = sphi 0, %s159
      %s161 = sphi 0, %s159
      %s162 = sphi 0, %s161
      %s176 = sphi 0, %s162
      %s180 = sphi 0, %s180
      %s182 = sphi 0, %s180
      %s183 = sphi 0, %s182
      %s197 = sphi 0, %s183
      %s201 = sphi 0, %s201
      %s203 = sphi 0, %s201
      %s204 = sphi 0, %s203
      %s218 = sphi 0, %s204
      %s222 = sphi 0, %s222
      %s224 = sphi 0, %s222
      %s225 = sphi 0, %s224
      %s239 = sphi 0, %s225
      %s243 = sphi 0, %s243
      %s245 = sphi 0, %s243
      %s246 = sphi 0, %s245
      %s260 = sphi 0, %s246
      %s266 = sphi 0, %s268
      %s269 = sphi 0, %s266
      %s270 = sphi 0, %s269
      %s286 = sphi 0, %s270
    $region4: #{tpu_custom_call.1} parent=1 // loop_header_branch
      %23 = sbr.rel (%p21) target = $region8
    $region5: #{tpu_custom_call.1} parent=1 // loop_body
      %s25 = ssub.s32 %s20, 1
      %s26 = ssub.s32 %s20, 2
      %s27 = sadd.s32 %s20, 1
      %s28 = ssub.s32 %s20, %s27
      %p29 = scmp.eq.s32.totalorder %s28, 0
      %s31 = sadd.s32 %s30, 1
      %s32 = scalar_select %p29, %s30, %s31
      %p35 = pneg %p29
      %p36 = scmp.eq.s32.totalorder %s20, 1
      %p37 = por %p35, %p36
      %p38 = scmp.ne.s32.totalorder %s30, %s33
      %p39 = scmp.eq.s32.totalorder %s20, 0
      %p40 = por %p38, %p39
      %p41 = scmp.ne.s32.totalorder %s30, %s33
      %p42 = scmp.eq.s32.totalorder %s25, 1
      %p43 = por %p41, %p42
      %p44 = scmp.ne.s32.totalorder %s33, %s34
      %p45 = scmp.eq.s32.totalorder %s25, 0
      %p46 = por %p44, %p45
      %p47 = scmp.ne.s32.totalorder %s33, %s34
      %p48 = scmp.eq.s32.totalorder %s26, 1
      %p49 = por %p47, %p48
      %p51 = scmp.ne.s32.totalorder %s34, %s50
      %p52 = scmp.eq.s32.totalorder %s26, 0
      %p53 = por %p51, %p52
      %s55 = sadd.s32 %s54, 1
      %p58 = scmp.eq.s32.totalorder %s20, 1
      %p59 = scmp.ne.s32.totalorder %s54, %s56
      %p60 = scmp.eq.s32.totalorder %s20, 0
      %p61 = por %p59, %p60
      %p62 = scmp.ne.s32.totalorder %s54, %s56
      %p63 = scmp.eq.s32.totalorder %s25, 1
      %p64 = por %p62, %p63
      %p65 = scmp.ne.s32.totalorder %s56, %s57
      %p66 = scmp.eq.s32.totalorder %s25, 0
      %p67 = por %p65, %p66
      %p68 = scmp.ne.s32.totalorder %s56, %s57
      %p69 = scmp.eq.s32.totalorder %s26, 1
      %p70 = por %p68, %p69
      %p72 = scmp.ne.s32.totalorder %s57, %s71
      %p73 = scmp.eq.s32.totalorder %s26, 0
      %p74 = por %p72, %p73
      %s76 = sadd.s32 %s75, 1
      %p79 = scmp.eq.s32.totalorder %s20, 1
      %p80 = scmp.ne.s32.totalorder %s75, %s77
      %p81 = scmp.eq.s32.totalorder %s20, 0
      %p82 = por %p80, %p81
      %p83 = scmp.ne.s32.totalorder %s75, %s77
      %p84 = scmp.eq.s32.totalorder %s25, 1
      %p85 = por %p83, %p84
      %p86 = scmp.ne.s32.totalorder %s77, %s78
      %p87 = scmp.eq.s32.totalorder %s25, 0
      %p88 = por %p86, %p87
      %p89 = scmp.ne.s32.totalorder %s77, %s78
      %p90 = scmp.eq.s32.totalorder %s26, 1
      %p91 = por %p89, %p90
      %p93 = scmp.ne.s32.totalorder %s78, %s92
      %p94 = scmp.eq.s32.totalorder %s26, 0
      %p95 = por %p93, %p94
      %s97 = sadd.s32 %s96, 1
      %p100 = scmp.eq.s32.totalorder %s20, 1
      %p101 = scmp.ne.s32.totalorder %s96, %s98
      %p102 = scmp.eq.s32.totalorder %s20, 0
      %p103 = por %p101, %p102
      %p104 = scmp.ne.s32.totalorder %s96, %s98
      %p105 = scmp.eq.s32.totalorder %s25, 1
      %p106 = por %p104, %p105
      %p107 = scmp.ne.s32.totalorder %s98, %s99
      %p108 = scmp.eq.s32.totalorder %s25, 0
      %p109 = por %p107, %p108
      %p110 = scmp.ne.s32.totalorder %s98, %s99
      %p111 = scmp.eq.s32.totalorder %s26, 1
      %p112 = por %p110, %p111
      %p114 = scmp.ne.s32.totalorder %s99, %s113
      %p115 = scmp.eq.s32.totalorder %s26, 0
      %p116 = por %p114, %p115
      %s118 = sadd.s32 %s117, 1
      %p121 = scmp.eq.s32.totalorder %s20, 1
      %p122 = scmp.ne.s32.totalorder %s117, %s119
      %p123 = scmp.eq.s32.totalorder %s20, 0
      %p124 = por %p122, %p123
      %p125 = scmp.ne.s32.totalorder %s117, %s119
      %p126 = scmp.eq.s32.totalorder %s25, 1
      %p127 = por %p125, %p126
      %p128 = scmp.ne.s32.totalorder %s119, %s120
      %p129 = scmp.eq.s32.totalorder %s25, 0
      %p130 = por %p128, %p129
      %p131 = scmp.ne.s32.totalorder %s119, %s120
      %p132 = scmp.eq.s32.totalorder %s26, 1
      %p133 = por %p131, %p132
      %p135 = scmp.ne.s32.totalorder %s120, %s134
      %p136 = scmp.eq.s32.totalorder %s26, 0
      %p137 = por %p135, %p136
      %s139 = sadd.s32 %s138, 1
      %p142 = scmp.eq.s32.totalorder %s20, 1
      %p143 = scmp.ne.s32.totalorder %s138, %s140
      %p144 = scmp.eq.s32.totalorder %s20, 0
      %p145 = por %p143, %p144
      %p146 = scmp.ne.s32.totalorder %s138, %s140
      %p147 = scmp.eq.s32.totalorder %s25, 1
      %p148 = por %p146, %p147
      %p149 = scmp.ne.s32.totalorder %s140, %s141
      %p150 = scmp.eq.s32.totalorder %s25, 0
      %p151 = por %p149, %p150
      %p152 = scmp.ne.s32.totalorder %s140, %s141
      %p153 = scmp.eq.s32.totalorder %s26, 1
      %p154 = por %p152, %p153
      %p156 = scmp.ne.s32.totalorder %s141, %s155
      %p157 = scmp.eq.s32.totalorder %s26, 0
      %p158 = por %p156, %p157
      %s160 = sadd.s32 %s159, 1
      %p163 = scmp.eq.s32.totalorder %s20, 1
      %p164 = scmp.ne.s32.totalorder %s159, %s161
      %p165 = scmp.eq.s32.totalorder %s20, 0
      %p166 = por %p164, %p165
      %p167 = scmp.ne.s32.totalorder %s159, %s161
      %p168 = scmp.eq.s32.totalorder %s25, 1
      %p169 = por %p167, %p168
      %p170 = scmp.ne.s32.totalorder %s161, %s162
      %p171 = scmp.eq.s32.totalorder %s25, 0
      %p172 = por %p170, %p171
      %p173 = scmp.ne.s32.totalorder %s161, %s162
      %p174 = scmp.eq.s32.totalorder %s26, 1
      %p175 = por %p173, %p174
      %p177 = scmp.ne.s32.totalorder %s162, %s176
      %p178 = scmp.eq.s32.totalorder %s26, 0
      %p179 = por %p177, %p178
      %s181 = sadd.s32 %s180, 1
      %p184 = scmp.eq.s32.totalorder %s20, 1
      %p185 = scmp.ne.s32.totalorder %s180, %s182
      %p186 = scmp.eq.s32.totalorder %s20, 0
      %p187 = por %p185, %p186
      %p188 = scmp.ne.s32.totalorder %s180, %s182
      %p189 = scmp.eq.s32.totalorder %s25, 1
      %p190 = por %p188, %p189
      %p191 = scmp.ne.s32.totalorder %s182, %s183
      %p192 = scmp.eq.s32.totalorder %s25, 0
      %p193 = por %p191, %p192
      %p194 = scmp.ne.s32.totalorder %s182, %s183
      %p195 = scmp.eq.s32.totalorder %s26, 1
      %p196 = por %p194, %p195
      %p198 = scmp.ne.s32.totalorder %s183, %s197
      %p199 = scmp.eq.s32.totalorder %s26, 0
      %p200 = por %p198, %p199
      %s202 = sadd.s32 %s201, 1
      %p205 = scmp.eq.s32.totalorder %s20, 1
      %p206 = scmp.ne.s32.totalorder %s201, %s203
      %p207 = scmp.eq.s32.totalorder %s20, 0
      %p208 = por %p206, %p207
      %p209 = scmp.ne.s32.totalorder %s201, %s203
      %p210 = scmp.eq.s32.totalorder %s25, 1
      %p211 = por %p209, %p210
      %p212 = scmp.ne.s32.totalorder %s203, %s204
      %p213 = scmp.eq.s32.totalorder %s25, 0
      %p214 = por %p212, %p213
      %p215 = scmp.ne.s32.totalorder %s203, %s204
      %p216 = scmp.eq.s32.totalorder %s26, 1
      %p217 = por %p215, %p216
      %p219 = scmp.ne.s32.totalorder %s204, %s218
      %p220 = scmp.eq.s32.totalorder %s26, 0
      %p221 = por %p219, %p220
      %s223 = sadd.s32 %s222, 1
      %p226 = scmp.eq.s32.totalorder %s20, 1
      %p227 = scmp.ne.s32.totalorder %s222, %s224
      %p228 = scmp.eq.s32.totalorder %s20, 0
      %p229 = por %p227, %p228
      %p230 = scmp.ne.s32.totalorder %s222, %s224
      %p231 = scmp.eq.s32.totalorder %s25, 1
      %p232 = por %p230, %p231
      %p233 = scmp.ne.s32.totalorder %s224, %s225
      %p234 = scmp.eq.s32.totalorder %s25, 0
      %p235 = por %p233, %p234
      %p236 = scmp.ne.s32.totalorder %s224, %s225
      %p237 = scmp.eq.s32.totalorder %s26, 1
      %p238 = por %p236, %p237
      %p240 = scmp.ne.s32.totalorder %s225, %s239
      %p241 = scmp.eq.s32.totalorder %s26, 0
      %p242 = por %p240, %p241
      %s244 = sadd.s32 %s243, 1
      %p247 = scmp.eq.s32.totalorder %s20, 1
      %p248 = scmp.ne.s32.totalorder %s243, %s245
      %p249 = scmp.eq.s32.totalorder %s20, 0
      %p250 = por %p248, %p249
      %p251 = scmp.ne.s32.totalorder %s243, %s245
      %p252 = scmp.eq.s32.totalorder %s25, 1
      %p253 = por %p251, %p252
      %p254 = scmp.ne.s32.totalorder %s245, %s246
      %p255 = scmp.eq.s32.totalorder %s25, 0
      %p256 = por %p254, %p255
      %p257 = scmp.ne.s32.totalorder %s245, %s246
      %p258 = scmp.eq.s32.totalorder %s26, 1
      %p259 = por %p257, %p258
      %p261 = scmp.ne.s32.totalorder %s246, %s260
      %p262 = scmp.eq.s32.totalorder %s26, 0
      %p263 = por %p261, %p262
      %s264 = ssub.s32 %s20, %s27
      %p265 = scmp.eq.s32.totalorder %s264, 0
      %s267 = sadd.s32 %s266, 1
      %s268 = scalar_select %p265, %s266, %s267
      %p271 = pneg %p265
      %p272 = scmp.eq.s32.totalorder %s20, 1
      %p273 = por %p271, %p272
      %p274 = scmp.ne.s32.totalorder %s266, %s269
      %p275 = scmp.eq.s32.totalorder %s20, 0
      %p276 = por %p274, %p275
      %p277 = scmp.ne.s32.totalorder %s266, %s269
      %p278 = scmp.eq.s32.totalorder %s25, 1
      %p279 = por %p277, %p278
      %p280 = scmp.ne.s32.totalorder %s269, %s270
      %p281 = scmp.eq.s32.totalorder %s25, 0
      %p282 = por %p280, %p281
      %p283 = scmp.ne.s32.totalorder %s269, %s270
      %p284 = scmp.eq.s32.totalorder %s26, 1
      %p285 = por %p283, %p284
      %p287 = scmp.ne.s32.totalorder %s270, %s286
      %p288 = scmp.eq.s32.totalorder %s26, 0
      %p289 = por %p287, %p288
      %p290 = scmp.le.s32.totalorder 1, %s20
      %p291 = scmp.lt.s32.totalorder %s20, 3
      %p292 = pnand %p290, %p291
      %p293 = pneg %p292
      // Predicated region
      $region9: #{tpu_custom_call.1} parent=5 // pred_check
        _
      $region10: #{tpu_custom_call.1} parent=5 // pred_check_branch
        %295 = sbr.rel (%p292) target = $region12
      $region11: #{tpu_custom_call.1} parent=5 // pred_region
        %s296 = ssub.s32 %s20, 1
        // Predicated region
        $region13: #{tpu_custom_call.1} parent=11 // pred_check
          %p297 = pneg %p67
        $region14: #{tpu_custom_call.1} parent=11 // pred_check_branch
          %299 = sbr.rel (%p297) target = $region16
        $region15: #{tpu_custom_call.1} parent=11 // pred_region
          _
        $region16: #{tpu_custom_call.1} parent=11 // pred_fallthru
          _
        // Predicated region
        $region17: #{tpu_custom_call.1} parent=11 // pred_check
          %p300 = pneg %p88
        $region18: #{tpu_custom_call.1} parent=11 // pred_check_branch
          %302 = sbr.rel (%p300) target = $region20
        $region19: #{tpu_custom_call.1} parent=11 // pred_region
          _
        $region20: #{tpu_custom_call.1} parent=11 // pred_fallthru
          _
        // Predicated region
        $region21: #{tpu_custom_call.1} parent=11 // pred_check
          %p303 = pneg %p109
        $region22: #{tpu_custom_call.1} parent=11 // pred_check_branch
          %305 = sbr.rel (%p303) target = $region24
        $region23: #{tpu_custom_call.1} parent=11 // pred_region
          _
        $region24: #{tpu_custom_call.1} parent=11 // pred_fallthru
          _
        // Predicated region
        $region25: #{tpu_custom_call.1} parent=11 // pred_check
          %p306 = pneg %p130
        $region26: #{tpu_custom_call.1} parent=11 // pred_check_branch
          %308 = sbr.rel (%p306) target = $region28
        $region27: #{tpu_custom_call.1} parent=11 // pred_region
          _
        $region28: #{tpu_custom_call.1} parent=11 // pred_fallthru
          _
        // Predicated region
        $region29: #{tpu_custom_call.1} parent=11 // pred_check
          %p309 = pneg %p151
        $region30: #{tpu_custom_call.1} parent=11 // pred_check_branch
          %311 = sbr.rel (%p309) target = $region32
        $region31: #{tpu_custom_call.1} parent=11 // pred_region
          _
        $region32: #{tpu_custom_call.1} parent=11 // pred_fallthru
          _
        // Predicated region
        $region33: #{tpu_custom_call.1} parent=11 // pred_check
          %p312 = pneg %p172
        $region34: #{tpu_custom_call.1} parent=11 // pred_check_branch
          %314 = sbr.rel (%p312) target = $region36
        $region35: #{tpu_custom_call.1} parent=11 // pred_region
          _
        $region36: #{tpu_custom_call.1} parent=11 // pred_fallthru
          _
        // Predicated region
        $region37: #{tpu_custom_call.1} parent=11 // pred_check
          %p315 = pneg %p193
        $region38: #{tpu_custom_call.1} parent=11 // pred_check_branch
          %317 = sbr.rel (%p315) target = $region40
        $region39: #{tpu_custom_call.1} parent=11 // pred_region
          _
        $region40: #{tpu_custom_call.1} parent=11 // pred_fallthru
          _
        // Predicated region
        $region41: #{tpu_custom_call.1} parent=11 // pred_check
          %p318 = pneg %p214
        $region42: #{tpu_custom_call.1} parent=11 // pred_check_branch
          %320 = sbr.rel (%p318) target = $region44
        $region43: #{tpu_custom_call.1} parent=11 // pred_region
          _
        $region44: #{tpu_custom_call.1} parent=11 // pred_fallthru
          _
        // Predicated region
        $region45: #{tpu_custom_call.1} parent=11 // pred_check
          %p321 = pneg %p235
        $region46: #{tpu_custom_call.1} parent=11 // pred_check_branch
          %323 = sbr.rel (%p321) target = $region48
        $region47: #{tpu_custom_call.1} parent=11 // pred_region
          _
        $region48: #{tpu_custom_call.1} parent=11 // pred_fallthru
          _
        // Predicated region
        $region49: #{tpu_custom_call.1} parent=11 // pred_check
          %p324 = pneg %p256
        $region50: #{tpu_custom_call.1} parent=11 // pred_check_branch
          %326 = sbr.rel (%p324) target = $region52
        $region51: #{tpu_custom_call.1} parent=11 // pred_region
          _
        $region52: #{tpu_custom_call.1} parent=11 // pred_fallthru
          _
      $region12: #{tpu_custom_call.1} parent=5 // pred_fallthru
        _
      %p327 = scmp.lt.s32.totalorder %s20, 2
      // Predicated region
      $region53: #{tpu_custom_call.1} parent=5 // pred_check
        %p328 = pneg %p327
      $region54: #{tpu_custom_call.1} parent=5 // pred_check_branch
        %330 = sbr.rel (%p328) target = $region56
      $region55: #{tpu_custom_call.1} parent=5 // pred_region
        // Predicated region
        $region57: #{tpu_custom_call.1} parent=55 // pred_check
          %p331 = pneg %p40
        $region58: #{tpu_custom_call.1} parent=55 // pred_check_branch
          %333 = sbr.rel (%p331) target = $region60
        $region59: #{tpu_custom_call.1} parent=55 // pred_region
          %p334 = scmp.lt.s32.totalorder %s20, 1
          %s335 = scalar_select %p334, %s20, 1
          %s336 = smul.addr %s335, 2
          %s337 = scalar_lea.vmem %s0, %s336
        $region60: #{tpu_custom_call.1} parent=55 // pred_fallthru
          _
      $region56: #{tpu_custom_call.1} parent=5 // pred_fallthru
        _
      %p338 = scmp.le.s32.totalorder 1, %s20
      %p339 = scmp.lt.s32.totalorder %s20, 3
      %p340 = pnand %p338, %p339
      %p341 = pneg %p340
      // Predicated region
      $region61: #{tpu_custom_call.1} parent=5 // pred_check
        _
      $region62: #{tpu_custom_call.1} parent=5 // pred_check_branch
        %343 = sbr.rel (%p340) target = $region64
      $region63: #{tpu_custom_call.1} parent=5 // pred_region
        %s344 = ssub.s32 %s20, 1
        %p345 = scmp.lt.s32.totalorder %s25, 1
        %s346 = scalar_select %p345, %s25, 1
        %s347 = smul.addr %s346, 2
        %s348 = scalar_lea.vmem %s0, %s347
        %p349 = pneg %p46
        %p350 = pneg %p43
        %p351 = pneg %p67
        %p352 = pneg %p64
        %p353 = pneg %p88
        %p354 = pneg %p85
        %p355 = pneg %p109
        %p356 = pneg %p106
        %p357 = pneg %p130
        %p358 = pneg %p127
        %p359 = pneg %p151
        %p360 = pneg %p148
        %p361 = pneg %p172
        %p362 = pneg %p169
        %p363 = pneg %p193
        %p364 = pneg %p190
        %p365 = pneg %p214
        %p366 = pneg %p211
        %p367 = pneg %p235
        %p368 = pneg %p232
        %p369 = pneg %p256
        %p370 = pneg %p253
        %p371 = pneg %p282
        %p372 = pneg %p279
        %s373 = sand.u32 %s269, 1
        %s374 = scalar_lea.sflag [#allocation3], %s373
        %s375 = sand.u32 %s269, 1
        %s376 = smul.addr %s375, 32
        %s377 = scalar_lea.vmem [#allocation2], %s376
        %p378 = scmp.lt.s32.totalorder %s25, 1
        %s379 = scalar_select %p378, %s25, 1
        %s380 = smul.addr %s379, 2
        %s381 = scalar_lea.vmem %s0, %s380
        %v383 = vld [vmem:[%s381] sm:$0x3]
        %v384 = vlaneseq
        %v385 = vand.u32 %v384, 127
        %v386 = vadd.s32 %v385, 128
        %vm387 = vcmp.lt.s32.totalorder %v385, 0
        %v388 = vsub.s32 0, %v385
        %v389 = vsel %vm387, %v388, %v385
        %v390 = vshrl.u32 %v389, 5
        %v391 = vand.u32 %v389, 31
        %v392 = vsub.s32 0, %v391
        %v393 = vsel %vm387, %v392, %v391
        %vm394 = vcmp.lt.s32.totalorder %v386, 0
        %v395 = vsub.s32 0, %v386
        %v396 = vsel %vm394, %v395, %v386
        %v397 = vshrl.u32 %v396, 5
        %v398 = vand.u32 %v396, 31
        %v399 = vsub.s32 0, %v398
        %v400 = vsel %vm394, %v399, %v398
        %vm401 = vcmp.ne.s32.totalorder %v393, 0
        %vm402 = vcmp.ne.s32.totalorder %v400, 0
        %vm403 = vcmp.lt.s32.totalorder %v393, 0
        %vm404 = vcmp.lt.s32.totalorder %v400, 0
        %vm405 = vmand %vm403, %vm401
        %vm406 = vmand %vm404, %vm402
        %v407 = vadd.s32 %v393, 32
        %v408 = vadd.s32 %v400, 32
        %v409 = vsel %vm405, %v407, %v393
        %v410 = vsel %vm406, %v408, %v400
        %vm411 = vcmp.eq.s32.totalorder %v409, 0
        %vm412 = vcmp.eq.s32.totalorder %v410, 0
        %vm413 = vcmp.eq.s32.totalorder %v409, 31
        %vm414 = vcmp.eq.s32.totalorder %v410, 31
        %v416 = vperm.slane %v383, 0
        %v417 = vperm.slane %v383, 1
        %420 = vrot.lane.b32.xlu0 %v416, 1
        %v421 = vpop.permute.xlu0 %420
        %422 = vrot.lane.b32.xlu0 %v417, 1
        %v423 = vpop.permute.xlu0 %422
        %vm424 = vcmp.lt.s32.totalorder %v385, 1
        %v425 = vsel %vm424, %v421, %v423
        %v426 = vsel %vm424, %v423, %v421
        %v427 = vsel %vm411, 0.0, %v426
        %v428 = vsel %vm412, 0.0, %v425
        %429 = vrot.lane.b32.xlu0 %v416, 127
        %v430 = vpop.permute.xlu0 %429
        %431 = vrot.lane.b32.xlu0 %v417, 127
        %v432 = vpop.permute.xlu0 %431
        %vm433 = vcmp.lt.s32.totalorder %v385, 127
        %v434 = vsel %vm433, %v430, %v432
        %v435 = vsel %vm433, %v432, %v430
        %v436 = vsel %vm413, 0.0, %v434
        %v437 = vsel %vm414, 0.0, %v435
        %v438 = vld [vmem:[%s1] sm:$0xff]
        %v439 = vld [vmem:[%s1 + $0x8] sm:$0xff]
        %v440 = vld [vmem:[%s1 + $0x10] sm:$0xff]
        %v441 = vld [vmem:[%s1 + $0x18] sm:$0xff]
        %443 = vset.pattern.permute.xlu0 0
        %444 = vperm.xlu0 %443, %v438
        %v445 = vpop.permute.xlu0 %444
        %448 = vset.pattern.permute.xlu0 0
        %449 = vperm.xlu0 %448, %v439
        %v450 = vpop.permute.xlu0 %449
        %453 = vset.pattern.permute.xlu0 0
        %454 = vperm.xlu0 %453, %v440
        %v455 = vpop.permute.xlu0 %454
        %458 = vset.pattern.permute.xlu0 0
        %459 = vperm.xlu0 %458, %v441
        %v460 = vpop.permute.xlu0 %459
        %v462 = vperm.slane %v427, 0
        %v463 = vperm.slane %v428, 0
        %v464 = vmul.f32 %v445, %v462
        %v465 = vmul.f32 %v445, %v463
        %v466 = vmul.f32 %v450, %v462
        %v467 = vmul.f32 %v450, %v463
        %v468 = vmul.f32 %v455, %v462
        %v469 = vmul.f32 %v455, %v463
        %v470 = vmul.f32 %v460, %v462
        %v471 = vmul.f32 %v460, %v463
        %472 = vset.pattern.permute.xlu0 1
        %473 = vperm.xlu0 %472, %v438
        %v474 = vpop.permute.xlu0 %473
        %476 = vset.pattern.permute.xlu0 1
        %477 = vperm.xlu0 %476, %v439
        %v478 = vpop.permute.xlu0 %477
        %480 = vset.pattern.permute.xlu0 1
        %481 = vperm.xlu0 %480, %v440
        %v482 = vpop.permute.xlu0 %481
        %484 = vset.pattern.permute.xlu0 1
        %485 = vperm.xlu0 %484, %v441
        %v486 = vpop.permute.xlu0 %485
        %v488 = vmul.f32 %v474, %v416
        %v489 = vmul.f32 %v474, %v417
        %v490 = vmul.f32 %v478, %v416
        %v491 = vmul.f32 %v478, %v417
        %v492 = vmul.f32 %v482, %v416
        %v493 = vmul.f32 %v482, %v417
        %v494 = vmul.f32 %v486, %v416
        %v495 = vmul.f32 %v486, %v417
        %v496 = vadd.f32 %v464, %v488
        %v497 = vadd.f32 %v465, %v489
        %v498 = vadd.f32 %v466, %v490
        %v499 = vadd.f32 %v467, %v491
        %v500 = vadd.f32 %v468, %v492
        %v501 = vadd.f32 %v469, %v493
        %v502 = vadd.f32 %v470, %v494
        %v503 = vadd.f32 %v471, %v495
        %504 = vset.pattern.permute.xlu0 2
        %505 = vperm.xlu0 %504, %v438
        %v506 = vpop.permute.xlu0 %505
        %508 = vset.pattern.permute.xlu0 2
        %509 = vperm.xlu0 %508, %v439
        %v510 = vpop.permute.xlu0 %509
        %512 = vset.pattern.permute.xlu0 2
        %513 = vperm.xlu0 %512, %v440
        %v514 = vpop.permute.xlu0 %513
        %516 = vset.pattern.permute.xlu0 2
        %517 = vperm.xlu0 %516, %v441
        %v518 = vpop.permute.xlu0 %517
        %v520 = vperm.slane %v436, 0
        %v521 = vperm.slane %v437, 0
        %v522 = vmul.f32 %v506, %v520
        %v523 = vmul.f32 %v506, %v521
        %v524 = vmul.f32 %v510, %v520
        %v525 = vmul.f32 %v510, %v521
        %v526 = vmul.f32 %v514, %v520
        %v527 = vmul.f32 %v514, %v521
        %v528 = vmul.f32 %v518, %v520
        %v529 = vmul.f32 %v518, %v521
        %v530 = vadd.f32 %v496, %v522
        %v531 = vadd.f32 %v497, %v523
        %v532 = vadd.f32 %v498, %v524
        %v533 = vadd.f32 %v499, %v525
        %v534 = vadd.f32 %v500, %v526
        %v535 = vadd.f32 %v501, %v527
        %v536 = vadd.f32 %v502, %v528
        %v537 = vadd.f32 %v503, %v529
        %v538 = vld [vmem:[%s2] sm:$0xff]
        %v539 = vld [vmem:[%s2 + $0x8] sm:$0xff]
        %v540 = vld [vmem:[%s2 + $0x10] sm:$0xff]
        %v541 = vld [vmem:[%s2 + $0x18] sm:$0xff]
        %543 = vset.pattern.permute.xlu0 0
        %544 = vperm.xlu0 %543, %v538
        %v545 = vpop.permute.xlu0 %544
        %548 = vset.pattern.permute.xlu0 0
        %549 = vperm.xlu0 %548, %v539
        %v550 = vpop.permute.xlu0 %549
        %553 = vset.pattern.permute.xlu0 0
        %554 = vperm.xlu0 %553, %v540
        %v555 = vpop.permute.xlu0 %554
        %558 = vset.pattern.permute.xlu0 0
        %559 = vperm.xlu0 %558, %v541
        %v560 = vpop.permute.xlu0 %559
        %v562 = vadd.f32 %v530, %v545
        %v563 = vadd.f32 %v531, %v545
        %v564 = vadd.f32 %v532, %v550
        %v565 = vadd.f32 %v533, %v550
        %v566 = vadd.f32 %v534, %v555
        %v567 = vadd.f32 %v535, %v555
        %v568 = vadd.f32 %v536, %v560
        %v569 = vadd.f32 %v537, %v560
        %v570 = vmul.f32 %v562, 0.2
        %v571 = vmul.f32 %v563, 0.2
        %v572 = vmul.f32 %v564, 0.2
        %v573 = vmul.f32 %v565, 0.2
        %v574 = vmul.f32 %v566, 0.2
        %v575 = vmul.f32 %v567, 0.2
        %v576 = vmul.f32 %v568, 0.2
        %v577 = vmul.f32 %v569, 0.2
        %v578 = vmax.f32 %v562, %v570
        %v579 = vmax.f32 %v563, %v571
        %v580 = vmax.f32 %v564, %v572
        %v581 = vmax.f32 %v565, %v573
        %v582 = vmax.f32 %v566, %v574
        %v583 = vmax.f32 %v567, %v575
        %v584 = vmax.f32 %v568, %v576
        %v585 = vmax.f32 %v569, %v577
        %586 = vrot.lane.b32.xlu0 %v578, 1
        %v587 = vpop.permute.xlu0 %586
        %588 = vrot.lane.b32.xlu0 %v580, 1
        %v589 = vpop.permute.xlu0 %588
        %590 = vrot.lane.b32.xlu0 %v582, 1
        %v591 = vpop.permute.xlu0 %590
        %592 = vrot.lane.b32.xlu0 %v584, 1
        %v593 = vpop.permute.xlu0 %592
        %594 = vrot.lane.b32.xlu0 %v579, 1
        %v595 = vpop.permute.xlu0 %594
        %596 = vrot.lane.b32.xlu0 %v581, 1
        %v597 = vpop.permute.xlu0 %596
        %598 = vrot.lane.b32.xlu0 %v583, 1
        %v599 = vpop.permute.xlu0 %598
        %600 = vrot.lane.b32.xlu0 %v585, 1
        %v601 = vpop.permute.xlu0 %600
        %v602 = vsel %vm424, %v587, %v595
        %v603 = vsel %vm424, %v589, %v597
        %v604 = vsel %vm424, %v591, %v599
        %v605 = vsel %vm424, %v593, %v601
        %v606 = vsel %vm424, %v595, %v587
        %v607 = vsel %vm424, %v597, %v589
        %v608 = vsel %vm424, %v599, %v591
        %v609 = vsel %vm424, %v601, %v593
        %v610 = vsel %vm411, 1, 0
        %v611 = vsel %vm412, 1, 0
        %vm612 = vcmp.eq.s32.totalorder %v610, 1
        %vm613 = vcmp.eq.s32.totalorder %v611, 1
        %v614 = vsel %vm612, 0.0, %v606
        %v615 = vsel %vm613, 0.0, %v602
        %v616 = vsel %vm612, 0.0, %v607
        %v617 = vsel %vm613, 0.0, %v603
        %v618 = vsel %vm612, 0.0, %v608
        %v619 = vsel %vm613, 0.0, %v604
        %v620 = vsel %vm612, 0.0, %v609
        %v621 = vsel %vm613, 0.0, %v605
        %622 = vrot.lane.b32.xlu0 %v578, 127
        %v623 = vpop.permute.xlu0 %622
        %624 = vrot.lane.b32.xlu0 %v580, 127
        %v625 = vpop.permute.xlu0 %624
        %626 = vrot.lane.b32.xlu0 %v582, 127
        %v627 = vpop.permute.xlu0 %626
        %628 = vrot.lane.b32.xlu0 %v584, 127
        %v629 = vpop.permute.xlu0 %628
        %630 = vrot.lane.b32.xlu0 %v579, 127
        %v631 = vpop.permute.xlu0 %630
        %632 = vrot.lane.b32.xlu0 %v581, 127
        %v633 = vpop.permute.xlu0 %632
        %634 = vrot.lane.b32.xlu0 %v583, 127
        %v635 = vpop.permute.xlu0 %634
        %636 = vrot.lane.b32.xlu0 %v585, 127
        %v637 = vpop.permute.xlu0 %636
        %v638 = vsel %vm433, %v623, %v631
        %v639 = vsel %vm433, %v625, %v633
        %v640 = vsel %vm433, %v627, %v635
        %v641 = vsel %vm433, %v629, %v637
        %v642 = vsel %vm433, %v631, %v623
        %v643 = vsel %vm433, %v633, %v625
        %v644 = vsel %vm433, %v635, %v627
        %v645 = vsel %vm433, %v637, %v629
        %v646 = vsel %vm413, 1, 0
        %v647 = vsel %vm414, 1, 0
        %vm648 = vcmp.eq.s32.totalorder %v646, 1
        %vm649 = vcmp.eq.s32.totalorder %v647, 1
        %v650 = vsel %vm648, 0.0, %v638
        %v651 = vsel %vm649, 0.0, %v642
        %v652 = vsel %vm648, 0.0, %v639
        %v653 = vsel %vm649, 0.0, %v643
        %v654 = vsel %vm648, 0.0, %v640
        %v655 = vsel %vm649, 0.0, %v644
        %v656 = vsel %vm648, 0.0, %v641
        %v657 = vsel %vm649, 0.0, %v645
        %v658 = vpack.c.bf16 %v616, %v614
        %v659 = vpack.c.bf16 %v617, %v615
        %v660 = vpack.c.bf16 %v620, %v618
        %v661 = vpack.c.bf16 %v621, %v619
        %v662 = vpack.c.bf16 %v580, %v578
        %v663 = vpack.c.bf16 %v581, %v579
        %v664 = vpack.c.bf16 %v584, %v582
        %v665 = vpack.c.bf16 %v585, %v583
        %v666 = vpack.c.bf16 %v652, %v650
        %v667 = vpack.c.bf16 %v653, %v651
        %v668 = vpack.c.bf16 %v656, %v654
        %v669 = vpack.c.bf16 %v657, %v655
        %v670 = vld [vmem:[%s3] sm:$0xf]
        %v671 = vld [vmem:[%s3 + $0x4] sm:$0xf]
        %v672 = vld [vmem:[%s3 + $0x8] sm:$0xf]
        %v673 = vld [vmem:[%s3 + $0xc] sm:$0xf]
        %v674 = vld [vmem:[%s4] sm:$0xff]
        %v675 = vld [vmem:[%s4 + $0x8] sm:$0xff]
        %v676 = vld [vmem:[%s4 + $0x10] sm:$0xff]
        %v677 = vld [vmem:[%s4 + $0x18] sm:$0xff]
        %679 = vset.pattern.permute.xlu0 0
        %680 = vperm.xlu0 %679, %v674
        %v681 = vpop.permute.xlu0 %680
        %684 = vset.pattern.permute.xlu0 0
        %685 = vperm.xlu0 %684, %v675
        %v686 = vpop.permute.xlu0 %685
        %689 = vset.pattern.permute.xlu0 0
        %690 = vperm.xlu0 %689, %v676
        %v691 = vpop.permute.xlu0 %690
        %694 = vset.pattern.permute.xlu0 0
        %695 = vperm.xlu0 %694, %v677
        %v696 = vpop.permute.xlu0 %695
        %v702 = vunpack.c.l.b16 %v670
        %v703 = vunpack.c.l.b16 %v671
        %v704 = vunpack.c.l.b16 %v672
        %v705 = vunpack.c.l.b16 %v673
        %v706 = vpack.c.b16 %v703, %v702
        %v707 = vpack.c.b16 %v705, %v704
        %vm708 = vcmask 785408
        %v710 = vsel %vm708, %v706, 0
        %v713 = vsel %vm708, %v707, 0
        %715 = vmatpush.bf16.msra.mxu0 0
        %716 = vmatpush.bf16.msra.mxu0 0
        %717 = vmatpush.bf16.msra.mxu0 %v668
        %718 = vmatpush.bf16.msra.mxu0 %v666
        %719 = vmatpush.bf16.msra.mxu0 %v664
        %720 = vmatpush.bf16.msra.mxu0 %v662
        %721 = vmatpush.bf16.msra.mxu0 %v660
        %722 = vmatpush.bf16.msra.mxu0 %v658
        %723 = vmatmul.bf16.gmra.mxu0 %v710
        %v724 = vpop.f32.mrf.mxu0
        %v725 = vadd.f32 %v681, %v724
        %v726 = vpop.f32.mrf.mxu0
        %v727 = vadd.f32 %v686, %v726
        %728 = vmatmul.bf16.gmra.mxu0 %v713
        %v729 = vpop.f32.mrf.mxu0
        %v730 = vadd.f32 %v691, %v729
        %v731 = vpop.f32.mrf.mxu0
        %v732 = vadd.f32 %v696, %v731
        %733 = vdwg.mxu0
        %734 = vmatpush.bf16.msra.mxu0 0
        %735 = vmatpush.bf16.msra.mxu0 0
        %736 = vmatpush.bf16.msra.mxu0 %v669
        %737 = vmatpush.bf16.msra.mxu0 %v667
        %738 = vmatpush.bf16.msra.mxu0 %v665
        %739 = vmatpush.bf16.msra.mxu0 %v663
        %740 = vmatpush.bf16.msra.mxu0 %v661
        %741 = vmatpush.bf16.msra.mxu0 %v659
        %742 = vmatmul.bf16.gmra.mxu0 %v710
        %v743 = vpop.f32.mrf.mxu0
        %v744 = vadd.f32 %v681, %v743
        %v745 = vpop.f32.mrf.mxu0
        %v746 = vadd.f32 %v686, %v745
        %747 = vmatmul.bf16.gmra.mxu0 %v713
        %v748 = vpop.f32.mrf.mxu0
        %v749 = vadd.f32 %v691, %v748
        %v750 = vpop.f32.mrf.mxu0
        %v751 = vadd.f32 %v696, %v750
        %752 = vdwg.mxu0
        %v753 = vmul.f32 %v725, 0.2
        %v754 = vmul.f32 %v744, 0.2
        %v755 = vmul.f32 %v727, 0.2
        %v756 = vmul.f32 %v746, 0.2
        %v757 = vmul.f32 %v730, 0.2
        %v758 = vmul.f32 %v749, 0.2
        %v759 = vmul.f32 %v732, 0.2
        %v760 = vmul.f32 %v751, 0.2
        %v761 = vmax.f32 %v725, %v753
        %v762 = vmax.f32 %v744, %v754
        %v763 = vmax.f32 %v727, %v755
        %v764 = vmax.f32 %v746, %v756
        %v765 = vmax.f32 %v730, %v757
        %v766 = vmax.f32 %v749, %v758
        %v767 = vmax.f32 %v732, %v759
        %v768 = vmax.f32 %v751, %v760
        %769 = vrot.lane.b32.xlu0 %v761, 1
        %v770 = vpop.permute.xlu0 %769
        %771 = vrot.lane.b32.xlu0 %v763, 1
        %v772 = vpop.permute.xlu0 %771
        %773 = vrot.lane.b32.xlu0 %v765, 1
        %v774 = vpop.permute.xlu0 %773
        %775 = vrot.lane.b32.xlu0 %v767, 1
        %v776 = vpop.permute.xlu0 %775
        %777 = vrot.lane.b32.xlu0 %v762, 1
        %v778 = vpop.permute.xlu0 %777
        %779 = vrot.lane.b32.xlu0 %v764, 1
        %v780 = vpop.permute.xlu0 %779
        %781 = vrot.lane.b32.xlu0 %v766, 1
        %v782 = vpop.permute.xlu0 %781
        %783 = vrot.lane.b32.xlu0 %v768, 1
        %v784 = vpop.permute.xlu0 %783
        %v785 = vsel %vm424, %v770, %v778
        %v786 = vsel %vm424, %v772, %v780
        %v787 = vsel %vm424, %v774, %v782
        %v788 = vsel %vm424, %v776, %v784
        %v789 = vsel %vm424, %v778, %v770
        %v790 = vsel %vm424, %v780, %v772
        %v791 = vsel %vm424, %v782, %v774
        %v792 = vsel %vm424, %v784, %v776
        %v793 = vsel %vm612, 0.0, %v789
        %v794 = vsel %vm613, 0.0, %v785
        %v795 = vsel %vm612, 0.0, %v790
        %v796 = vsel %vm613, 0.0, %v786
        %v797 = vsel %vm612, 0.0, %v791
        %v798 = vsel %vm613, 0.0, %v787
        %v799 = vsel %vm612, 0.0, %v792
        %v800 = vsel %vm613, 0.0, %v788
        %801 = vrot.lane.b32.xlu0 %v761, 127
        %v802 = vpop.permute.xlu0 %801
        %803 = vrot.lane.b32.xlu0 %v763, 127
        %v804 = vpop.permute.xlu0 %803
        %805 = vrot.lane.b32.xlu0 %v765, 127
        %v806 = vpop.permute.xlu0 %805
        %807 = vrot.lane.b32.xlu0 %v767, 127
        %v808 = vpop.permute.xlu0 %807
        %809 = vrot.lane.b32.xlu0 %v762, 127
        %v810 = vpop.permute.xlu0 %809
        %811 = vrot.lane.b32.xlu0 %v764, 127
        %v812 = vpop.permute.xlu0 %811
        %813 = vrot.lane.b32.xlu0 %v766, 127
        %v814 = vpop.permute.xlu0 %813
        %815 = vrot.lane.b32.xlu0 %v768, 127
        %v816 = vpop.permute.xlu0 %815
        %v817 = vsel %vm433, %v802, %v810
        %v818 = vsel %vm433, %v804, %v812
        %v819 = vsel %vm433, %v806, %v814
        %v820 = vsel %vm433, %v808, %v816
        %v821 = vsel %vm433, %v810, %v802
        %v822 = vsel %vm433, %v812, %v804
        %v823 = vsel %vm433, %v814, %v806
        %v824 = vsel %vm433, %v816, %v808
        %v825 = vsel %vm648, 0.0, %v817
        %v826 = vsel %vm649, 0.0, %v821
        %v827 = vsel %vm648, 0.0, %v818
        %v828 = vsel %vm649, 0.0, %v822
        %v829 = vsel %vm648, 0.0, %v819
        %v830 = vsel %vm649, 0.0, %v823
        %v831 = vsel %vm648, 0.0, %v820
        %v832 = vsel %vm649, 0.0, %v824
        %v833 = vpack.c.bf16 %v795, %v793
        %v834 = vpack.c.bf16 %v796, %v794
        %v835 = vpack.c.bf16 %v799, %v797
        %v836 = vpack.c.bf16 %v800, %v798
        %v837 = vpack.c.bf16 %v763, %v761
        %v838 = vpack.c.bf16 %v764, %v762
        %v839 = vpack.c.bf16 %v767, %v765
        %v840 = vpack.c.bf16 %v768, %v766
        %v841 = vpack.c.bf16 %v827, %v825
        %v842 = vpack.c.bf16 %v828, %v826
        %v843 = vpack.c.bf16 %v831, %v829
        %v844 = vpack.c.bf16 %v832, %v830
        %v845 = vld [vmem:[%s5] sm:$0xf]
        %v846 = vld [vmem:[%s5 + $0x4] sm:$0xf]
        %v847 = vld [vmem:[%s5 + $0x8] sm:$0xf]
        %v848 = vld [vmem:[%s5 + $0xc] sm:$0xf]
        %v849 = vld [vmem:[%s6] sm:$0xff]
        %v850 = vld [vmem:[%s6 + $0x8] sm:$0xff]
        %v851 = vld [vmem:[%s6 + $0x10] sm:$0xff]
        %v852 = vld [vmem:[%s6 + $0x18] sm:$0xff]
        %854 = vset.pattern.permute.xlu0 0
        %855 = vperm.xlu0 %854, %v849
        %v856 = vpop.permute.xlu0 %855
        %859 = vset.pattern.permute.xlu0 0
        %860 = vperm.xlu0 %859, %v850
        %v861 = vpop.permute.xlu0 %860
        %864 = vset.pattern.permute.xlu0 0
        %865 = vperm.xlu0 %864, %v851
        %v866 = vpop.permute.xlu0 %865
        %869 = vset.pattern.permute.xlu0 0
        %870 = vperm.xlu0 %869, %v852
        %v871 = vpop.permute.xlu0 %870
        %v877 = vunpack.c.l.b16 %v845
        %v878 = vunpack.c.l.b16 %v846
        %v879 = vunpack.c.l.b16 %v847
        %v880 = vunpack.c.l.b16 %v848
        %v881 = vpack.c.b16 %v878, %v877
        %v882 = vpack.c.b16 %v880, %v879
        %v884 = vsel %vm708, %v881, 0
        %v887 = vsel %vm708, %v882, 0
        %889 = vmatpush.bf16.msra.mxu0 0
        %890 = vmatpush.bf16.msra.mxu0 0
        %891 = vmatpush.bf16.msra.mxu0 %v843
        %892 = vmatpush.bf16.msra.mxu0 %v841
        %893 = vmatpush.bf16.msra.mxu0 %v839
        %894 = vmatpush.bf16.msra.mxu0 %v837
        %895 = vmatpush.bf16.msra.mxu0 %v835
        %896 = vmatpush.bf16.msra.mxu0 %v833
        %897 = vmatmul.bf16.gmra.mxu0 %v884
        %v898 = vpop.f32.mrf.mxu0
        %v899 = vadd.f32 %v856, %v898
        %v900 = vpop.f32.mrf.mxu0
        %v901 = vadd.f32 %v861, %v900
        %902 = vmatmul.bf16.gmra.mxu0 %v887
        %v903 = vpop.f32.mrf.mxu0
        %v904 = vadd.f32 %v866, %v903
        %v905 = vpop.f32.mrf.mxu0
        %v906 = vadd.f32 %v871, %v905
        %907 = vdwg.mxu0
        %908 = vmatpush.bf16.msra.mxu0 0
        %909 = vmatpush.bf16.msra.mxu0 0
        %910 = vmatpush.bf16.msra.mxu0 %v844
        %911 = vmatpush.bf16.msra.mxu0 %v842
        %912 = vmatpush.bf16.msra.mxu0 %v840
        %913 = vmatpush.bf16.msra.mxu0 %v838
        %914 = vmatpush.bf16.msra.mxu0 %v836
        %915 = vmatpush.bf16.msra.mxu0 %v834
        %916 = vmatmul.bf16.gmra.mxu0 %v884
        %v917 = vpop.f32.mrf.mxu0
        %v918 = vadd.f32 %v856, %v917
        %v919 = vpop.f32.mrf.mxu0
        %v920 = vadd.f32 %v861, %v919
        %921 = vmatmul.bf16.gmra.mxu0 %v887
        %v922 = vpop.f32.mrf.mxu0
        %v923 = vadd.f32 %v866, %v922
        %v924 = vpop.f32.mrf.mxu0
        %v925 = vadd.f32 %v871, %v924
        %926 = vdwg.mxu0
        %v927 = vmul.f32 %v899, 0.2
        %v928 = vmul.f32 %v918, 0.2
        %v929 = vmul.f32 %v901, 0.2
        %v930 = vmul.f32 %v920, 0.2
        %v931 = vmul.f32 %v904, 0.2
        %v932 = vmul.f32 %v923, 0.2
        %v933 = vmul.f32 %v906, 0.2
        %v934 = vmul.f32 %v925, 0.2
        %v935 = vmax.f32 %v899, %v927
        %v936 = vmax.f32 %v918, %v928
        %v937 = vmax.f32 %v901, %v929
        %v938 = vmax.f32 %v920, %v930
        %v939 = vmax.f32 %v904, %v931
        %v940 = vmax.f32 %v923, %v932
        %v941 = vmax.f32 %v906, %v933
        %v942 = vmax.f32 %v925, %v934
        %947 = vrot.lane.b32.xlu0 %v935, 96
        %v948 = vpop.permute.xlu0 %947
        %949 = vrot.lane.b32.xlu0 %v937, 96
        %v950 = vpop.permute.xlu0 %949
        %951 = vrot.lane.b32.xlu0 %v939, 96
        %v952 = vpop.permute.xlu0 %951
        %953 = vrot.lane.b32.xlu0 %v941, 96
        %v954 = vpop.permute.xlu0 %953
        %959 = vrot.lane.b32.xlu0 %v935, 64
        %v960 = vpop.permute.xlu0 %959
        %961 = vrot.lane.b32.xlu0 %v937, 64
        %v962 = vpop.permute.xlu0 %961
        %963 = vrot.lane.b32.xlu0 %v939, 64
        %v964 = vpop.permute.xlu0 %963
        %965 = vrot.lane.b32.xlu0 %v941, 64
        %v966 = vpop.permute.xlu0 %965
        %971 = vrot.lane.b32.xlu0 %v935, 32
        %v972 = vpop.permute.xlu0 %971
        %973 = vrot.lane.b32.xlu0 %v937, 32
        %v974 = vpop.permute.xlu0 %973
        %975 = vrot.lane.b32.xlu0 %v939, 32
        %v976 = vpop.permute.xlu0 %975
        %977 = vrot.lane.b32.xlu0 %v941, 32
        %v978 = vpop.permute.xlu0 %977
        %987 = vrot.lane.b32.xlu0 %v936, 96
        %v988 = vpop.permute.xlu0 %987
        %989 = vrot.lane.b32.xlu0 %v938, 96
        %v990 = vpop.permute.xlu0 %989
        %991 = vrot.lane.b32.xlu0 %v940, 96
        %v992 = vpop.permute.xlu0 %991
        %993 = vrot.lane.b32.xlu0 %v942, 96
        %v994 = vpop.permute.xlu0 %993
        %999 = vrot.lane.b32.xlu0 %v936, 64
        %v1000 = vpop.permute.xlu0 %999
        %1001 = vrot.lane.b32.xlu0 %v938, 64
        %v1002 = vpop.permute.xlu0 %1001
        %1003 = vrot.lane.b32.xlu0 %v940, 64
        %v1004 = vpop.permute.xlu0 %1003
        %1005 = vrot.lane.b32.xlu0 %v942, 64
        %v1006 = vpop.permute.xlu0 %1005
        %1011 = vrot.lane.b32.xlu0 %v936, 32
        %v1012 = vpop.permute.xlu0 %1011
        %1013 = vrot.lane.b32.xlu0 %v938, 32
        %v1014 = vpop.permute.xlu0 %1013
        %1015 = vrot.lane.b32.xlu0 %v940, 32
        %v1016 = vpop.permute.xlu0 %1015
        %1017 = vrot.lane.b32.xlu0 %v942, 32
        %v1018 = vpop.permute.xlu0 %1017
        %v1023 = vpack.c.bf16 %v937, %v935
        %v1024 = vpack.c.bf16 %v941, %v939
        %v1025 = vpack.c.bf16 %v950, %v948
        %v1026 = vpack.c.bf16 %v954, %v952
        %v1027 = vpack.c.bf16 %v962, %v960
        %v1028 = vpack.c.bf16 %v966, %v964
        %v1029 = vpack.c.bf16 %v974, %v972
        %v1030 = vpack.c.bf16 %v978, %v976
        %v1031 = vpack.c.bf16 %v938, %v936
        %v1032 = vpack.c.bf16 %v942, %v940
        %v1033 = vpack.c.bf16 %v990, %v988
        %v1034 = vpack.c.bf16 %v994, %v992
        %v1035 = vpack.c.bf16 %v1002, %v1000
        %v1036 = vpack.c.bf16 %v1006, %v1004
        %v1037 = vpack.c.bf16 %v1014, %v1012
        %v1038 = vpack.c.bf16 %v1018, %v1016
        %v1039 = vld [vmem:[%s7] sm:$0xf]
        %v1040 = vld [vmem:[%s7 + $0x4] sm:$0xf]
        %v1041 = vld [vmem:[%s7 + $0x8] sm:$0xf]
        %v1042 = vld [vmem:[%s7 + $0xc] sm:$0xf]
        %v1043 = vld [vmem:[%s8] sm:$0x1]
        %v1045 = vperm.slane %v1043, 0
        %v1051 = vunpack.c.l.b16 %v1039
        %v1052 = vunpack.c.l.b16 %v1040
        %v1053 = vunpack.c.l.b16 %v1041
        %v1054 = vunpack.c.l.b16 %v1042
        %v1055 = vpack.c.b16 %v1052, %v1051
        %v1056 = vpack.c.b16 %v1054, %v1053
        %vm1059 = vcmask 261120
        %v1061 = vsel %vm1059, %v1023, 0
        %v1064 = vsel %vm1059, %v1024, 0
        %v1067 = vsel %vm1059, %v1025, 0
        %v1070 = vsel %vm1059, %v1026, 0
        %v1073 = vsel %vm1059, %v1027, 0
        %v1076 = vsel %vm1059, %v1028, 0
        %v1079 = vsel %vm1059, %v1029, 0
        %v1082 = vsel %vm1059, %v1030, 0
        %v1085 = vsel %vm1059, %v1031, 0
        %v1088 = vsel %vm1059, %v1032, 0
        %v1091 = vsel %vm1059, %v1033, 0
        %v1094 = vsel %vm1059, %v1034, 0
        %v1097 = vsel %vm1059, %v1035, 0
        %v1100 = vsel %vm1059, %v1036, 0
        %v1103 = vsel %vm1059, %v1037, 0
        %v1106 = vsel %vm1059, %v1038, 0
        %1108 = vmatpush.bf16.msra.mxu0 0
        %1109 = vmatpush.bf16.msra.mxu0 0
        %1110 = vmatpush.bf16.msra.mxu0 0
        %1111 = vmatpush.bf16.msra.mxu0 0
        %1112 = vmatpush.bf16.msra.mxu0 0
        %1113 = vmatpush.bf16.msra.mxu0 0
        %1114 = vmatpush.bf16.msra.mxu0 %v1056
        %1115 = vmatpush.bf16.msra.mxu0 %v1055
        %1116 = vmatmul.bf16.gmra.mxu0 %v1061
        %v1117 = vpop.f32.mrf.mxu0
        %v1118 = vadd.f32 %v1045, %v1117
        %v1119 = vpop.f32.mrf.mxu0
        %v1120 = vadd.f32 %v1045, %v1119
        %1121 = vmatmul.bf16.gmra.mxu0 %v1064
        %v1122 = vpop.f32.mrf.mxu0
        %v1123 = vadd.f32 %v1045, %v1122
        %v1124 = vpop.f32.mrf.mxu0
        %v1125 = vadd.f32 %v1045, %v1124
        %1126 = vmatmul.bf16.gmra.mxu0 %v1067
        %v1127 = vpop.f32.mrf.mxu0
        %v1128 = vadd.f32 %v1045, %v1127
        %v1129 = vpop.f32.mrf.mxu0
        %v1130 = vadd.f32 %v1045, %v1129
        %1131 = vmatmul.bf16.gmra.mxu0 %v1070
        %v1132 = vpop.f32.mrf.mxu0
        %v1133 = vadd.f32 %v1045, %v1132
        %v1134 = vpop.f32.mrf.mxu0
        %v1135 = vadd.f32 %v1045, %v1134
        %1136 = vmatmul.bf16.gmra.mxu0 %v1073
        %v1137 = vpop.f32.mrf.mxu0
        %v1138 = vadd.f32 %v1045, %v1137
        %v1139 = vpop.f32.mrf.mxu0
        %v1140 = vadd.f32 %v1045, %v1139
        %1141 = vmatmul.bf16.gmra.mxu0 %v1076
        %v1142 = vpop.f32.mrf.mxu0
        %v1143 = vadd.f32 %v1045, %v1142
        %v1144 = vpop.f32.mrf.mxu0
        %v1145 = vadd.f32 %v1045, %v1144
        %1146 = vmatmul.bf16.gmra.mxu0 %v1079
        %v1147 = vpop.f32.mrf.mxu0
        %v1148 = vadd.f32 %v1045, %v1147
        %v1149 = vpop.f32.mrf.mxu0
        %v1150 = vadd.f32 %v1045, %v1149
        %1151 = vmatmul.bf16.gmra.mxu0 %v1082
        %v1152 = vpop.f32.mrf.mxu0
        %v1153 = vadd.f32 %v1045, %v1152
        %v1154 = vpop.f32.mrf.mxu0
        %v1155 = vadd.f32 %v1045, %v1154
        %1156 = vmatmul.bf16.gmra.mxu0 %v1085
        %v1157 = vpop.f32.mrf.mxu0
        %v1158 = vadd.f32 %v1045, %v1157
        %v1159 = vpop.f32.mrf.mxu0
        %v1160 = vadd.f32 %v1045, %v1159
        %1161 = vmatmul.bf16.gmra.mxu0 %v1088
        %v1162 = vpop.f32.mrf.mxu0
        %v1163 = vadd.f32 %v1045, %v1162
        %v1164 = vpop.f32.mrf.mxu0
        %v1165 = vadd.f32 %v1045, %v1164
        %1166 = vmatmul.bf16.gmra.mxu0 %v1091
        %v1167 = vpop.f32.mrf.mxu0
        %v1168 = vadd.f32 %v1045, %v1167
        %v1169 = vpop.f32.mrf.mxu0
        %v1170 = vadd.f32 %v1045, %v1169
        %1171 = vmatmul.bf16.gmra.mxu0 %v1094
        %v1172 = vpop.f32.mrf.mxu0
        %v1173 = vadd.f32 %v1045, %v1172
        %v1174 = vpop.f32.mrf.mxu0
        %v1175 = vadd.f32 %v1045, %v1174
        %1176 = vmatmul.bf16.gmra.mxu0 %v1097
        %v1177 = vpop.f32.mrf.mxu0
        %v1178 = vadd.f32 %v1045, %v1177
        %v1179 = vpop.f32.mrf.mxu0
        %v1180 = vadd.f32 %v1045, %v1179
        %1181 = vmatmul.bf16.gmra.mxu0 %v1100
        %v1182 = vpop.f32.mrf.mxu0
        %v1183 = vadd.f32 %v1045, %v1182
        %v1184 = vpop.f32.mrf.mxu0
        %v1185 = vadd.f32 %v1045, %v1184
        %1186 = vmatmul.bf16.gmra.mxu0 %v1103
        %v1187 = vpop.f32.mrf.mxu0
        %v1188 = vadd.f32 %v1045, %v1187
        %v1189 = vpop.f32.mrf.mxu0
        %v1190 = vadd.f32 %v1045, %v1189
        %1191 = vmatmul.bf16.gmra.mxu0 %v1106
        %v1192 = vpop.f32.mrf.mxu0
        %v1193 = vadd.f32 %v1045, %v1192
        %v1194 = vpop.f32.mrf.mxu0
        %v1195 = vadd.f32 %v1045, %v1194
        %1196 = vdwg.mxu0
        %v1197 = vmul.f32 %v1118, 0.2
        %v1198 = vmul.f32 %v1120, 0.2
        %v1199 = vmul.f32 %v1123, 0.2
        %v1200 = vmul.f32 %v1125, 0.2
        %v1201 = vmul.f32 %v1128, 0.2
        %v1202 = vmul.f32 %v1130, 0.2
        %v1203 = vmul.f32 %v1133, 0.2
        %v1204 = vmul.f32 %v1135, 0.2
        %v1205 = vmul.f32 %v1138, 0.2
        %v1206 = vmul.f32 %v1140, 0.2
        %v1207 = vmul.f32 %v1143, 0.2
        %v1208 = vmul.f32 %v1145, 0.2
        %v1209 = vmul.f32 %v1148, 0.2
        %v1210 = vmul.f32 %v1150, 0.2
        %v1211 = vmul.f32 %v1153, 0.2
        %v1212 = vmul.f32 %v1155, 0.2
        %v1213 = vmul.f32 %v1158, 0.2
        %v1214 = vmul.f32 %v1160, 0.2
        %v1215 = vmul.f32 %v1163, 0.2
        %v1216 = vmul.f32 %v1165, 0.2
        %v1217 = vmul.f32 %v1168, 0.2
        %v1218 = vmul.f32 %v1170, 0.2
        %v1219 = vmul.f32 %v1173, 0.2
        %v1220 = vmul.f32 %v1175, 0.2
        %v1221 = vmul.f32 %v1178, 0.2
        %v1222 = vmul.f32 %v1180, 0.2
        %v1223 = vmul.f32 %v1183, 0.2
        %v1224 = vmul.f32 %v1185, 0.2
        %v1225 = vmul.f32 %v1188, 0.2
        %v1226 = vmul.f32 %v1190, 0.2
        %v1227 = vmul.f32 %v1193, 0.2
        %v1228 = vmul.f32 %v1195, 0.2
        %v1229 = vmax.f32 %v1118, %v1197
        %v1230 = vmax.f32 %v1120, %v1198
        %v1231 = vmax.f32 %v1123, %v1199
        %v1232 = vmax.f32 %v1125, %v1200
        %v1233 = vmax.f32 %v1128, %v1201
        %v1234 = vmax.f32 %v1130, %v1202
        %v1235 = vmax.f32 %v1133, %v1203
        %v1236 = vmax.f32 %v1135, %v1204
        %v1237 = vmax.f32 %v1138, %v1205
        %v1238 = vmax.f32 %v1140, %v1206
        %v1239 = vmax.f32 %v1143, %v1207
        %v1240 = vmax.f32 %v1145, %v1208
        %v1241 = vmax.f32 %v1148, %v1209
        %v1242 = vmax.f32 %v1150, %v1210
        %v1243 = vmax.f32 %v1153, %v1211
        %v1244 = vmax.f32 %v1155, %v1212
        %v1245 = vmax.f32 %v1158, %v1213
        %v1246 = vmax.f32 %v1160, %v1214
        %v1247 = vmax.f32 %v1163, %v1215
        %v1248 = vmax.f32 %v1165, %v1216
        %v1249 = vmax.f32 %v1168, %v1217
        %v1250 = vmax.f32 %v1170, %v1218
        %v1251 = vmax.f32 %v1173, %v1219
        %v1252 = vmax.f32 %v1175, %v1220
        %v1253 = vmax.f32 %v1178, %v1221
        %v1254 = vmax.f32 %v1180, %v1222
        %v1255 = vmax.f32 %v1183, %v1223
        %v1256 = vmax.f32 %v1185, %v1224
        %v1257 = vmax.f32 %v1188, %v1225
        %v1258 = vmax.f32 %v1190, %v1226
        %v1259 = vmax.f32 %v1193, %v1227
        %v1260 = vmax.f32 %v1195, %v1228
        %v1261 = vpack.c.bf16 %v1230, %v1229
        %v1262 = vpack.c.bf16 %v1232, %v1231
        %v1263 = vpack.c.bf16 %v1234, %v1233
        %v1264 = vpack.c.bf16 %v1236, %v1235
        %v1265 = vpack.c.bf16 %v1238, %v1237
        %v1266 = vpack.c.bf16 %v1240, %v1239
        %v1267 = vpack.c.bf16 %v1242, %v1241
        %v1268 = vpack.c.bf16 %v1244, %v1243
        %v1269 = vpack.c.bf16 %v1246, %v1245
        %v1270 = vpack.c.bf16 %v1248, %v1247
        %v1271 = vpack.c.bf16 %v1250, %v1249
        %v1272 = vpack.c.bf16 %v1252, %v1251
        %v1273 = vpack.c.bf16 %v1254, %v1253
        %v1274 = vpack.c.bf16 %v1256, %v1255
        %v1275 = vpack.c.bf16 %v1258, %v1257
        %v1276 = vpack.c.bf16 %v1260, %v1259
        %v1277 = vld [vmem:[%s9] sm:$0xf]
        %v1278 = vld [vmem:[%s9 + $0x4] sm:$0xf]
        %v1279 = vld [vmem:[%s9 + $0x8] sm:$0xf]
        %v1280 = vld [vmem:[%s9 + $0xc] sm:$0xf]
        %v1281 = vld [vmem:[%s10] sm:$0x1]
        %v1283 = vperm.slane %v1281, 0
        %v1289 = vunpack.c.l.b16 %v1277
        %v1290 = vunpack.c.l.b16 %v1278
        %v1291 = vunpack.c.l.b16 %v1279
        %v1292 = vunpack.c.l.b16 %v1280
        %v1293 = vpack.c.b16 %v1290, %v1289
        %v1294 = vpack.c.b16 %v1292, %v1291
        %v1298 = vsel %vm1059, %v1261, 0
        %v1301 = vsel %vm1059, %v1262, 0
        %v1304 = vsel %vm1059, %v1263, 0
        %v1307 = vsel %vm1059, %v1264, 0
        %v1310 = vsel %vm1059, %v1265, 0
        %v1313 = vsel %vm1059, %v1266, 0
        %v1316 = vsel %vm1059, %v1267, 0
        %v1319 = vsel %vm1059, %v1268, 0
        %v1322 = vsel %vm1059, %v1269, 0
        %v1325 = vsel %vm1059, %v1270, 0
        %v1328 = vsel %vm1059, %v1271, 0
        %v1331 = vsel %vm1059, %v1272, 0
        %v1334 = vsel %vm1059, %v1273, 0
        %v1337 = vsel %vm1059, %v1274, 0
        %v1340 = vsel %vm1059, %v1275, 0
        %v1343 = vsel %vm1059, %v1276, 0
        %1345 = vmatpush.bf16.msra.mxu0 0
        %1346 = vmatpush.bf16.msra.mxu0 0
        %1347 = vmatpush.bf16.msra.mxu0 0
        %1348 = vmatpush.bf16.msra.mxu0 0
        %1349 = vmatpush.bf16.msra.mxu0 0
        %1350 = vmatpush.bf16.msra.mxu0 0
        %1351 = vmatpush.bf16.msra.mxu0 %v1294
        %1352 = vmatpush.bf16.msra.mxu0 %v1293
        %1353 = vmatmul.bf16.gmra.mxu0 %v1298
        %v1354 = vpop.f32.mrf.mxu0
        %v1355 = vadd.f32 %v1283, %v1354
        %v1356 = vpop.f32.mrf.mxu0
        %v1357 = vadd.f32 %v1283, %v1356
        %1358 = vmatmul.bf16.gmra.mxu0 %v1301
        %v1359 = vpop.f32.mrf.mxu0
        %v1360 = vadd.f32 %v1283, %v1359
        %v1361 = vpop.f32.mrf.mxu0
        %v1362 = vadd.f32 %v1283, %v1361
        %1363 = vmatmul.bf16.gmra.mxu0 %v1304
        %v1364 = vpop.f32.mrf.mxu0
        %v1365 = vadd.f32 %v1283, %v1364
        %v1366 = vpop.f32.mrf.mxu0
        %v1367 = vadd.f32 %v1283, %v1366
        %1368 = vmatmul.bf16.gmra.mxu0 %v1307
        %v1369 = vpop.f32.mrf.mxu0
        %v1370 = vadd.f32 %v1283, %v1369
        %v1371 = vpop.f32.mrf.mxu0
        %v1372 = vadd.f32 %v1283, %v1371
        %1373 = vmatmul.bf16.gmra.mxu0 %v1310
        %v1374 = vpop.f32.mrf.mxu0
        %v1375 = vadd.f32 %v1283, %v1374
        %v1376 = vpop.f32.mrf.mxu0
        %v1377 = vadd.f32 %v1283, %v1376
        %1378 = vmatmul.bf16.gmra.mxu0 %v1313
        %v1379 = vpop.f32.mrf.mxu0
        %v1380 = vadd.f32 %v1283, %v1379
        %v1381 = vpop.f32.mrf.mxu0
        %v1382 = vadd.f32 %v1283, %v1381
        %1383 = vmatmul.bf16.gmra.mxu0 %v1316
        %v1384 = vpop.f32.mrf.mxu0
        %v1385 = vadd.f32 %v1283, %v1384
        %v1386 = vpop.f32.mrf.mxu0
        %v1387 = vadd.f32 %v1283, %v1386
        %1388 = vmatmul.bf16.gmra.mxu0 %v1319
        %v1389 = vpop.f32.mrf.mxu0
        %v1390 = vadd.f32 %v1283, %v1389
        %v1391 = vpop.f32.mrf.mxu0
        %v1392 = vadd.f32 %v1283, %v1391
        %1393 = vmatmul.bf16.gmra.mxu0 %v1322
        %v1394 = vpop.f32.mrf.mxu0
        %v1395 = vadd.f32 %v1283, %v1394
        %v1396 = vpop.f32.mrf.mxu0
        %v1397 = vadd.f32 %v1283, %v1396
        %1398 = vmatmul.bf16.gmra.mxu0 %v1325
        %v1399 = vpop.f32.mrf.mxu0
        %v1400 = vadd.f32 %v1283, %v1399
        %v1401 = vpop.f32.mrf.mxu0
        %v1402 = vadd.f32 %v1283, %v1401
        %1403 = vmatmul.bf16.gmra.mxu0 %v1328
        %v1404 = vpop.f32.mrf.mxu0
        %v1405 = vadd.f32 %v1283, %v1404
        %v1406 = vpop.f32.mrf.mxu0
        %v1407 = vadd.f32 %v1283, %v1406
        %1408 = vmatmul.bf16.gmra.mxu0 %v1331
        %v1409 = vpop.f32.mrf.mxu0
        %v1410 = vadd.f32 %v1283, %v1409
        %v1411 = vpop.f32.mrf.mxu0
        %v1412 = vadd.f32 %v1283, %v1411
        %1413 = vmatmul.bf16.gmra.mxu0 %v1334
        %v1414 = vpop.f32.mrf.mxu0
        %v1415 = vadd.f32 %v1283, %v1414
        %v1416 = vpop.f32.mrf.mxu0
        %v1417 = vadd.f32 %v1283, %v1416
        %1418 = vmatmul.bf16.gmra.mxu0 %v1337
        %v1419 = vpop.f32.mrf.mxu0
        %v1420 = vadd.f32 %v1283, %v1419
        %v1421 = vpop.f32.mrf.mxu0
        %v1422 = vadd.f32 %v1283, %v1421
        %1423 = vmatmul.bf16.gmra.mxu0 %v1340
        %v1424 = vpop.f32.mrf.mxu0
        %v1425 = vadd.f32 %v1283, %v1424
        %v1426 = vpop.f32.mrf.mxu0
        %v1427 = vadd.f32 %v1283, %v1426
        %1428 = vmatmul.bf16.gmra.mxu0 %v1343
        %v1429 = vpop.f32.mrf.mxu0
        %v1430 = vadd.f32 %v1283, %v1429
        %v1431 = vpop.f32.mrf.mxu0
        %v1432 = vadd.f32 %v1283, %v1431
        %1433 = vdwg.mxu0
        %1438 = vrot.lane.b32.xlu0 %v1365, 16
        %v1439 = vpop.permute.xlu0 %1438
        %1440 = vrot.lane.b32.xlu0 %v1367, 16
        %v1441 = vpop.permute.xlu0 %1440
        %1442 = vrot.lane.b32.xlu0 %v1370, 16
        %v1443 = vpop.permute.xlu0 %1442
        %1444 = vrot.lane.b32.xlu0 %v1372, 16
        %v1445 = vpop.permute.xlu0 %1444
        %1454 = vrot.lane.b32.xlu0 %v1375, 32
        %v1455 = vpop.permute.xlu0 %1454
        %1456 = vrot.lane.b32.xlu0 %v1377, 32
        %v1457 = vpop.permute.xlu0 %1456
        %1458 = vrot.lane.b32.xlu0 %v1380, 32
        %v1459 = vpop.permute.xlu0 %1458
        %1460 = vrot.lane.b32.xlu0 %v1382, 32
        %v1461 = vpop.permute.xlu0 %1460
        %1470 = vrot.lane.b32.xlu0 %v1385, 48
        %v1471 = vpop.permute.xlu0 %1470
        %1472 = vrot.lane.b32.xlu0 %v1387, 48
        %v1473 = vpop.permute.xlu0 %1472
        %1474 = vrot.lane.b32.xlu0 %v1390, 48
        %v1475 = vpop.permute.xlu0 %1474
        %1476 = vrot.lane.b32.xlu0 %v1392, 48
        %v1477 = vpop.permute.xlu0 %1476
        %1486 = vrot.lane.b32.xlu0 %v1395, 64
        %v1487 = vpop.permute.xlu0 %1486
        %1488 = vrot.lane.b32.xlu0 %v1397, 64
        %v1489 = vpop.permute.xlu0 %1488
        %1490 = vrot.lane.b32.xlu0 %v1400, 64
        %v1491 = vpop.permute.xlu0 %1490
        %1492 = vrot.lane.b32.xlu0 %v1402, 64
        %v1493 = vpop.permute.xlu0 %1492
        %1502 = vrot.lane.b32.xlu0 %v1405, 80
        %v1503 = vpop.permute.xlu0 %1502
        %1504 = vrot.lane.b32.xlu0 %v1407, 80
        %v1505 = vpop.permute.xlu0 %1504
        %1506 = vrot.lane.b32.xlu0 %v1410, 80
        %v1507 = vpop.permute.xlu0 %1506
        %1508 = vrot.lane.b32.xlu0 %v1412, 80
        %v1509 = vpop.permute.xlu0 %1508
        %1518 = vrot.lane.b32.xlu0 %v1415, 96
        %v1519 = vpop.permute.xlu0 %1518
        %1520 = vrot.lane.b32.xlu0 %v1417, 96
        %v1521 = vpop.permute.xlu0 %1520
        %1522 = vrot.lane.b32.xlu0 %v1420, 96
        %v1523 = vpop.permute.xlu0 %1522
        %1524 = vrot.lane.b32.xlu0 %v1422, 96
        %v1525 = vpop.permute.xlu0 %1524
        %1534 = vrot.lane.b32.xlu0 %v1425, 112
        %v1535 = vpop.permute.xlu0 %1534
        %1536 = vrot.lane.b32.xlu0 %v1427, 112
        %v1537 = vpop.permute.xlu0 %1536
        %1538 = vrot.lane.b32.xlu0 %v1430, 112
        %v1539 = vpop.permute.xlu0 %1538
        %1540 = vrot.lane.b32.xlu0 %v1432, 112
        %v1541 = vpop.permute.xlu0 %1540
        %vm1546 = vcmask 130048
        %v1547 = vsel %vm1546, %v1355, %v1439
        %v1548 = vsel %vm1546, %v1357, %v1441
        %v1549 = vsel %vm1546, %v1360, %v1443
        %v1550 = vsel %vm1546, %v1362, %v1445
        %v1551 = vsel %vm1059, %v1547, %v1455
        %v1552 = vsel %vm1059, %v1548, %v1457
        %v1553 = vsel %vm1059, %v1549, %v1459
        %v1554 = vsel %vm1059, %v1550, %v1461
        %vm1555 = vcmask 392192
        %v1556 = vsel %vm1555, %v1551, %v1471
        %v1557 = vsel %vm1555, %v1552, %v1473
        %v1558 = vsel %vm1555, %v1553, %v1475
        %v1559 = vsel %vm1555, %v1554, %v1477
        %vm1560 = vcmask 523264
        %v1561 = vsel %vm1560, %v1556, %v1487
        %v1562 = vsel %vm1560, %v1557, %v1489
        %v1563 = vsel %vm1560, %v1558, %v1491
        %v1564 = vsel %vm1560, %v1559, %v1493
        %vm1565 = vcmask 654336
        %v1566 = vsel %vm1565, %v1561, %v1503
        %v1567 = vsel %vm1565, %v1562, %v1505
        %v1568 = vsel %vm1565, %v1563, %v1507
        %v1569 = vsel %vm1565, %v1564, %v1509
        %v1570 = vsel %vm708, %v1566, %v1519
        %v1571 = vsel %vm708, %v1567, %v1521
        %v1572 = vsel %vm708, %v1568, %v1523
        %v1573 = vsel %vm708, %v1569, %v1525
        %vm1574 = vcmask 916480
        %v1575 = vsel %vm1574, %v1570, %v1535
        %v1576 = vsel %vm1574, %v1571, %v1537
        %v1577 = vsel %vm1574, %v1572, %v1539
        %v1578 = vsel %vm1574, %v1573, %v1541
        %1579 = vst [vmem:[%s377] sm:$0xff] %v1575
        %1580 = vst [vmem:[%s377 + $0x8] sm:$0xff] %v1576
        %1581 = vst [vmem:[%s377 + $0x10] sm:$0xff] %v1577
        %1582 = vst [vmem:[%s377 + $0x18] sm:$0xff] %v1578
        %s1583 = sand.u32 %s269, 1
        %s1584 = scalar_lea.sflag [#allocation3], %s1583
        %s1585 = sand.u32 %s269, 1
        %s1586 = smul.addr %s1585, 32
        %s1587 = scalar_lea.vmem [#allocation2], %s1586
        // Predicated region
        $region65: #{tpu_custom_call.1} parent=63 // pred_check
          %p1588 = pneg %p279
        $region66: #{tpu_custom_call.1} parent=63 // pred_check_branch
          %1590 = sbr.rel (%p1588) target = $region68
        $region67: #{tpu_custom_call.1} parent=63 // pred_region
          %1592 = vsyncadd %s1584, 0
          %s1593 = smul.addr %s25, 4
          %s1594 = smul.addr %s1593, 8
          %s1595 = scalar_lea.hbm %s11, %s1594
          %s1596 = sshll.u32 %s1587, 4
          %s1597 = int_to_ptr.vmem [resolvable:$true] %s1596
          %s1598 = sshll.u32 %s1595, 4
          %s1599 = int_to_ptr.hbm [resolvable:$true] %s1598
          %1604 = dma.vmem_to_hbm [thread:$0]  %s1597, 512, %s1599, %s1584, 128, 128, 8
        $region68: #{tpu_custom_call.1} parent=63 // pred_fallthru
          _
      $region64: #{tpu_custom_call.1} parent=5 // pred_fallthru
        _
      %p1605 = scmp.le.s32.totalorder 2, %s20
      // Predicated region
      $region69: #{tpu_custom_call.1} parent=5 // pred_check
        %p1606 = pneg %p1605
      $region70: #{tpu_custom_call.1} parent=5 // pred_check_branch
        %1608 = sbr.rel (%p1606) target = $region72
      $region71: #{tpu_custom_call.1} parent=5 // pred_region
        %s1609 = ssub.s32 %s20, 2
        // Predicated region
        $region73: #{tpu_custom_call.1} parent=71 // pred_check
          %p1610 = pneg %p285
        $region74: #{tpu_custom_call.1} parent=71 // pred_check_branch
          %1612 = sbr.rel (%p1610) target = $region76
        $region75: #{tpu_custom_call.1} parent=71 // pred_region
          %s1613 = sand.u32 %s270, 1
          %s1614 = scalar_lea.sflag [#allocation3], %s1613
          %s1615 = sand.u32 %s270, 1
          %s1616 = smul.addr %s1615, 32
          %s1617 = scalar_lea.vmem [#allocation2], %s1616
          %1619 = dma.done %s1614, 512
        $region76: #{tpu_custom_call.1} parent=71 // pred_fallthru
          _
      $region72: #{tpu_custom_call.1} parent=5 // pred_fallthru
        _
    $region6: #{tpu_custom_call.1} parent=1 // loop_footer
      %s24 = sadd.s32 1, %s20
    $region7: #{tpu_custom_call.1} parent=1 // loop_footer_branch
      %19 = sbr.rel target = $region3
    $region8: #{tpu_custom_call.1} parent=1 // loop_exit
      _
    %1620 = vsyncpa [#allocation3], 1
    %s1621 = scalar_lea.sflag [#allocation3], 1
    %1622 = vsyncpa %s1621, 1

</llo_original>
